<compile_context>
chip_gen: v7x
topology: tpu7x:2x2x1
jax: 0.10.0
libtpu: 0.0.40
codegen_flags: <defaults>
</compile_context>

<pallas_src>
import functools

import jax
import jax.numpy as jnp
from jax import lax
from jax.experimental import pallas as pl
from jax.experimental.pallas import tpu as pltpu


KPAD = 32     # conv contraction dim: C*kh*kw = 27 zero-padded to 32
EPAD = 128    # lane-dense embedding width for the head (sliced back to embed)


# ----------------------------------------------------------------------------
# Pallas kernels
# ----------------------------------------------------------------------------
def conv_relu_gap_kernel(inv_hw, p_ref, w_ref, b_ref, o_ref):
    """Fused conv-as-matmul + bias + ReLU + global-average-pool.

    One grid step handles `bimg` COMPLETE images: a single MXU matmul over
    (bimg*HW, K) rows, then a per-image pool done as VALU partial sums over
    row groups of 8 followed by one cross-sublane (XLU) reduce.  Features are
    written directly in bf16.
    """
    bimg, hw, k = p_ref.shape
    cout = w_ref.shape[1]

    p = p_ref[...].reshape(bimg * hw, k)                       # 8-aligned view
    y = jnp.dot(p, w_ref[...], preferred_element_type=jnp.float32)
    y = jnp.maximum(y + b_ref[...], 0.0)                       # bias + ReLU

    # Per-image GAP: VALU adds over hw//8 row-groups, then one 8-sublane reduce.
    y = y.reshape(bimg, hw // 8, 8, cout)
    part = jnp.sum(y, axis=1)                                  # (bimg, 8, cout) VALU
    feat = jnp.sum(part, axis=1) * inv_hw                      # (bimg, cout)   XLU
    o_ref[0] = feat.astype(o_ref.dtype)


def linear_bn_kernel(x_ref, w_ref, b_ref, g_ref, beta_ref, o_ref):
    """Fused Linear + BatchNorm1d (training-mode batch statistics).

    x [N, F] @ w [F, Epad] + b [1, Epad] -> y [N, Epad]
    out = gamma * (y - mean_batch) / sqrt(var_batch + 1e-5) + beta

    NOTE: BN batch statistics require the whole batch N in a single block; do
    NOT tile N across a grid axis here (per-tile stats would be wrong).
    Padded lanes (embed..Epad-1) have y == 0 for every row, so d == 0 and the
    output there is exactly beta (zero-padded); the wrapper slices them off.
    """
    y = jnp.dot(x_ref[...], w_ref[...], preferred_element_type=jnp.float32)
    y = y + b_ref[...]
    n = y.shape[0]
    mean = jnp.sum(y, axis=0, keepdims=True) * (1.0 / n)
    d = y - mean
    var = jnp.sum(d * d, axis=0, keepdims=True) * (1.0 / n)   # biased, like PyTorch fwd
    inv = lax.rsqrt(var + 1e-5)
    o_ref[...] = g_ref[...] * d * inv + beta_ref[...]


# ----------------------------------------------------------------------------
# pallas_call wrappers
# ----------------------------------------------------------------------------
def fused_conv_relu_gap(patches, w_mat, bias):
    """patches [N, HW, K] bf16, w_mat [K, Cout] bf16, bias [1, Cout] f32
    -> features [N, Cout] bf16."""
    n, hw, kpad = patches.shape
    cout = w_mat.shape[1]
    assert hw % 8 == 0, hw
    # >= 2 blocks along the parallel image axis so v7x megacore can use both TCs.
    bimg = n // 2 if (n >= 2 and n % 2 == 0) else n
    nblk = n // bimg
    inv_hw = 1.0 / hw

    flops = 2 * n * hw * kpad * cout
    bytes_accessed = (
        patches.size * patches.dtype.itemsize
        + w_mat.size * w_mat.dtype.itemsize
        + bias.size * bias.dtype.itemsize
        + n * cout * 2
    )

    feats = pl.pallas_call(
        functools.partial(conv_relu_gap_kernel, inv_hw),
        out_shape=jax.ShapeDtypeStruct((nblk, bimg, cout), jnp.bfloat16),
        grid_spec=pltpu.PrefetchScalarGridSpec(
            num_scalar_prefetch=0,
            grid=(nblk,),
            in_specs=[
                pl.BlockSpec((bimg, hw, kpad), lambda i: (i, 0, 0)),
                pl.BlockSpec((kpad, cout), lambda i: (0, 0)),
                pl.BlockSpec((1, cout), lambda i: (0, 0)),
            ],
            out_specs=pl.BlockSpec((1, bimg, cout), lambda i: (i, 0, 0)),
        ),
        compiler_params=pltpu.CompilerParams(
            dimension_semantics=("parallel",),
            vmem_limit_bytes=32 * 1024 * 1024),
        cost_estimate=pl.CostEstimate(
            flops=flops, transcendentals=0, bytes_accessed=bytes_accessed),
    )(patches, w_mat, bias)
    return feats.reshape(n, cout)


def linear_bn(x, w, b, g, beta):
    """x [N, F] bf16, w [F, Epad] bf16, b/g/beta [1, Epad] f32 -> [N, Epad] f32."""
    n, f = x.shape
    epad = w.shape[1]
    flops = 2 * n * f * epad
    bytes_accessed = (x.size * x.dtype.itemsize + w.size * w.dtype.itemsize
                      + 3 * epad * 4 + n * epad * 4)
    return pl.pallas_call(
        linear_bn_kernel,
        out_shape=jax.ShapeDtypeStruct((n, epad), jnp.float32),
        grid=(1,),
        in_specs=[
            pl.BlockSpec((n, f), lambda i: (0, 0)),
            pl.BlockSpec((f, epad), lambda i: (0, 0)),
            pl.BlockSpec((1, epad), lambda i: (0, 0)),
            pl.BlockSpec((1, epad), lambda i: (0, 0)),
            pl.BlockSpec((1, epad), lambda i: (0, 0)),
        ],
        out_specs=pl.BlockSpec((n, epad), lambda i: (0, 0)),
        compiler_params=pltpu.CompilerParams(dimension_semantics=("arbitrary",)),
        cost_estimate=pl.CostEstimate(
            flops=flops, transcendentals=0, bytes_accessed=bytes_accessed),
    )(x, w, b, g, beta)


# ----------------------------------------------------------------------------
# Glue: im2col (plain JAX), parameter setup, full forward
# ----------------------------------------------------------------------------
def im2col_padded(x, kh, kw, stride=1, pad=1, kpad=KPAD):
    """x [N, C, H, W] -> patches [N, Ho*Wo, kpad] (C slow, kh*kw fast; K zero-padded)."""
    n, c, h, w = x.shape
    xp = jnp.pad(x, ((0, 0), (0, 0), (pad, pad), (pad, pad)))
    ho = (h + 2 * pad - kh) // stride + 1
    wo = (w + 2 * pad - kw) // stride + 1
    cols = []
    for i in range(kh):
        for j in range(kw):
            cols.append(xp[:, :, i:i + ho * stride:stride, j:j + wo * stride:stride])
    # [N, kh*kw, C, Ho, Wo] -> [N, Ho, Wo, C, kh*kw] -> [N, Ho*Wo, C*kh*kw]
    patches = jnp.stack(cols, axis=1).transpose(0, 3, 4, 2, 1)
    patches = patches.reshape(n, ho * wo, c * kh * kw)
    k = c * kh * kw
    patches = jnp.pad(patches, ((0, 0), (0, 0), (0, kpad - k)))
    return patches, ho, wo


def make_params(key, cin=3, feat=256, embed=32, kh=3, kw=3):
    k = jax.random.split(key, 4)
    return {
        "conv_w": jax.random.normal(k[0], (feat, cin, kh, kw), jnp.float32) * 0.05,
        "conv_b": jax.random.normal(k[1], (feat,), jnp.float32) * 0.05,
        "lin_w": jax.random.normal(k[2], (embed, feat), jnp.float32) * 0.05,  # [E, F] like nn.Linear
        "lin_b": jax.random.normal(k[3], (embed,), jnp.float32) * 0.05,
        "bn_gamma": jnp.ones((embed,), jnp.float32),
        "bn_beta": jnp.zeros((embed,), jnp.float32),
    }


def prepare_params(params, kpad=KPAD, epad=EPAD):
    """One-time layout prep: transpose / zero-pad / cast weights for the kernels."""
    feat, cin, kh, kw = params["conv_w"].shape
    embed = params["lin_w"].shape[0]
    k = cin * kh * kw
    conv_w_mat = jnp.pad(params["conv_w"].reshape(feat, k).T, ((0, kpad - k), (0, 0)))
    lin_w = jnp.pad(params["lin_w"].T, ((0, 0), (0, epad - embed)))     # [F, Epad]

    def pad_row(v):
        # Zero-padded: padded lanes end up exactly 0 in the head output and are
        # sliced off in the wrapper.
        return jnp.pad(v, (0, epad - embed)).reshape(1, epad).astype(jnp.float32)

    return {
        "conv_w_mat": conv_w_mat.astype(jnp.bfloat16),                  # [Kpad, Cout]
        "conv_b": params["conv_b"].reshape(1, feat).astype(jnp.float32),
        "lin_w": lin_w.astype(jnp.bfloat16),
        "lin_b": pad_row(params["lin_b"]),
        "bn_gamma": pad_row(params["bn_gamma"]),
        "bn_beta": pad_row(params["bn_beta"]),
    }


def encoder_cnn_forward(images, prep, *, embed, kh=3, kw=3):
    patches, _, _ = im2col_padded(images.astype(jnp.bfloat16), kh, kw,
                                  stride=1, pad=1, kpad=KPAD)

    # backbone stand-in: conv3x3 + ReLU + adaptive-avg-pool(1,1) + .view(N,-1), fused.
    features = fused_conv_relu_gap(patches, prep["conv_w_mat"], prep["conv_b"])  # bf16 [N, F]

    # Linear + BatchNorm1d at Epad(=128) lanes, slice back to embed_size.
    out_pad = linear_bn(features, prep["lin_w"],
                        prep["lin_b"], prep["bn_gamma"], prep["bn_beta"])
    return out_pad[:, :embed]


def reference_forward(images, params):
    """Pure-JAX reference with identical math & precision (bf16 in, f32 accumulate)."""
    conv = lax.conv_general_dilated(
        images.astype(jnp.bfloat16), params["conv_w"].astype(jnp.bfloat16),
        (1, 1), [(1, 1), (1, 1)],
        dimension_numbers=("NCHW", "OIHW", "NCHW"),
        preferred_element_type=jnp.float32,
    ) + params["conv_b"].reshape(1, -1, 1, 1)
    feats = jnp.maximum(conv, 0.0).mean(axis=(2, 3))
    y = jnp.dot(feats.astype(jnp.bfloat16), params["lin_w"].T.astype(jnp.bfloat16),
                preferred_element_type=jnp.float32) + params["lin_b"]
    mean = y.mean(axis=0, keepdims=True)
    var = ((y - mean) ** 2).mean(axis=0, keepdims=True)
    return params["bn_gamma"] * (y - mean) / jnp.sqrt(var + 1e-5) + params["bn_beta"]


if __name__ == "__main__":
    key = jax.random.PRNGKey(0)
    k_img, k_par = jax.random.split(key)

    N, C, H, W = 4, 3, 16, 16          # small NCHW images
    FEAT, EMBED = 256, 32              # backbone feature width (stand-in for 2048), embed_size

    images = jax.random.normal(k_img, (N, C, H, W), jnp.float32)
    params = make_params(k_par, cin=C, feat=FEAT, embed=EMBED)
    prep = prepare_params(params)

    forward = jax.jit(functools.partial(encoder_cnn_forward, embed=EMBED))
    out = jax.block_until_ready(forward(images, prep))

    ref = reference_forward(images, params)
    assert out.shape == (N, EMBED), out.shape
    max_err = float(jnp.max(jnp.abs(out - ref)))
    assert jnp.allclose(out, ref, atol=2e-2, rtol=2e-2), max_err

    print("KERNEL_OK")
</pallas_src>

<mosaic_0001>
module attributes {stable_mosaic.version = 11 : i64} {
  func.func @conv_relu_gap_kernel(%arg0: i32, %arg1: memref<2x256x32xbf16, #tpu.memory_space<vmem>>, %arg2: memref<32x256xbf16, #tpu.memory_space<vmem>>, %arg3: memref<1x256xf32, #tpu.memory_space<vmem>>, %arg4: memref<1x2x256xbf16, #tpu.memory_space<vmem>>) attributes {dimension_semantics = [#tpu.dimension_semantics<parallel>], iteration_bounds = array<i64: 2>, scalar_prefetch = 0 : i64, scratch_operands = 0 : i64, tpu.core_type = #tpu.core_type<tc>, window_params = [{transform_indices = @transform_0, window_bounds = array<i64: 2, 256, 32>}, {pipeline_mode = #tpu.pipeline_mode<synchronous>, transform_indices = @transform_1, window_bounds = array<i64: 32, 256>}, {pipeline_mode = #tpu.pipeline_mode<synchronous>, transform_indices = @transform_2, window_bounds = array<i64: 1, 256>}, {transform_indices = @transform_3, window_bounds = array<i64: 1, 2, 256>}]} {
    %c0 = arith.constant 0 : index
    %c0_0 = arith.constant 0 : index
    %c0_1 = arith.constant 0 : index
    %0 = vector.load %arg1[%c0, %c0_0, %c0_1] : memref<2x256x32xbf16, #tpu.memory_space<vmem>>, vector<2x256x32xbf16>
    %1 = vector.shape_cast %0 : vector<2x256x32xbf16> to vector<512x32xbf16>
    %c0_2 = arith.constant 0 : index
    %c0_3 = arith.constant 0 : index
    %2 = vector.load %arg2[%c0_2, %c0_3] : memref<32x256xbf16, #tpu.memory_space<vmem>>, vector<32x256xbf16>
    %cst = arith.constant dense<0.000000e+00> : vector<512x256xf32>
    %3 = tpu.matmul %1, %2, %cst {dimension_numbers = #tpu.dot_dimension_numbers<[1], [0], [0], [1], [0, 0, 1, 1], [], []>} : vector<512x32xbf16>, vector<32x256xbf16>, vector<512x256xf32> -> vector<512x256xf32>
    %c0_4 = arith.constant 0 : index
    %c0_5 = arith.constant 0 : index
    %4 = vector.load %arg3[%c0_4, %c0_5] : memref<1x256xf32, #tpu.memory_space<vmem>>, vector<1x256xf32>
    %5 = vector.broadcast %4 : vector<1x256xf32> to vector<512x256xf32>
    %6 = arith.addf %3, %5 : vector<512x256xf32>
    %cst_6 = arith.constant 0.000000e+00 : f32
    %7 = vector.broadcast %cst_6 : f32 to vector<512x256xf32>
    %8 = arith.maximumf %6, %7 : vector<512x256xf32>
    %9 = vector.shape_cast %8 : vector<512x256xf32> to vector<2x32x8x256xf32>
    %cst_7 = arith.constant dense<0.000000e+00> : vector<2x8x256xf32>
    %10 = vector.multi_reduction <add>, %9, %cst_7 [1] : vector<2x32x8x256xf32> to vector<2x8x256xf32>
    %cst_8 = arith.constant dense<0.000000e+00> : vector<2x256xf32>
    %11 = vector.multi_reduction <add>, %10, %cst_8 [1] : vector<2x8x256xf32> to vector<2x256xf32>
    %cst_9 = arith.constant 3.906250e-03 : f32
    %12 = vector.broadcast %cst_9 : f32 to vector<2x256xf32>
    %13 = arith.mulf %11, %12 : vector<2x256xf32>
    %14 = arith.truncf %13 : vector<2x256xf32> to vector<2x256xbf16>
    %c0_10 = arith.constant 0 : index
    %c0_11 = arith.constant 0 : index
    %c0_12 = arith.constant 0 : index
    %15 = vector.load %arg4[%c0_10, %c0_11, %c0_12] : memref<1x2x256xbf16, #tpu.memory_space<vmem>>, vector<1x2x256xbf16>
    %16 = vector.shape_cast %15 : vector<1x2x256xbf16> to vector<2x256xbf16>
    %17 = vector.shape_cast %14 : vector<2x256xbf16> to vector<1x2x256xbf16>
    tpu.vector_store %arg4[%c0_10, %c0_11, %c0_12], %17 {strides = array<i32>} : memref<1x2x256xbf16, #tpu.memory_space<vmem>>, vector<1x2x256xbf16>,
    return
  }
  func.func @transform_0(%arg0: i32) -> (i32, i32, i32) {
    %c0_i32 = arith.constant 0 : i32
    %c0_i32_0 = arith.constant 0 : i32
    %c0_i32_1 = arith.constant 0 : i32
    return %arg0, %c0_i32, %c0_i32_0 : i32, i32, i32
  }
  func.func @transform_1(%arg0: i32) -> (i32, i32) {
    %c0_i32 = arith.constant 0 : i32
    %c0_i32_0 = arith.constant 0 : i32
    %c0_i32_1 = arith.constant 0 : i32
    return %c0_i32, %c0_i32_0 : i32, i32
  }
  func.func @transform_2(%arg0: i32) -> (i32, i32) {
    %c0_i32 = arith.constant 0 : i32
    %c0_i32_0 = arith.constant 0 : i32
    %c0_i32_1 = arith.constant 0 : i32
    return %c0_i32, %c0_i32_0 : i32, i32
  }
  func.func @transform_3(%arg0: i32) -> (i32, i32, i32) {
    %c0_i32 = arith.constant 0 : i32
    %c0_i32_0 = arith.constant 0 : i32
    %c0_i32_1 = arith.constant 0 : i32
    return %arg0, %c0_i32, %c0_i32_0 : i32, i32, i32
  }
}

module attributes {stable_mosaic.version = 11 : i64} {
  func.func @linear_bn_kernel(%arg0: i32, %arg1: memref<4x256xbf16, #tpu.memory_space<vmem>>, %arg2: memref<256x128xbf16, #tpu.memory_space<vmem>>, %arg3: memref<1x128xf32, #tpu.memory_space<vmem>>, %arg4: memref<1x128xf32, #tpu.memory_space<vmem>>, %arg5: memref<1x128xf32, #tpu.memory_space<vmem>>, %arg6: memref<4x128xf32, #tpu.memory_space<vmem>>) attributes {dimension_semantics = [#tpu.dimension_semantics<arbitrary>], iteration_bounds = array<i64: 1>, scalar_prefetch = 0 : i64, scratch_operands = 0 : i64, tpu.core_type = #tpu.core_type<tc>, window_params = [{pipeline_mode = #tpu.pipeline_mode<synchronous>, transform_indices = @transform_0, window_bounds = array<i64: 4, 256>}, {pipeline_mode = #tpu.pipeline_mode<synchronous>, transform_indices = @transform_1, window_bounds = array<i64: 256, 128>}, {pipeline_mode = #tpu.pipeline_mode<synchronous>, transform_indices = @transform_2, window_bounds = array<i64: 1, 128>}, {pipeline_mode = #tpu.pipeline_mode<synchronous>, transform_indices = @transform_3, window_bounds = array<i64: 1, 128>}, {pipeline_mode = #tpu.pipeline_mode<synchronous>, transform_indices = @transform_4, window_bounds = array<i64: 1, 128>}, {pipeline_mode = #tpu.pipeline_mode<synchronous>, transform_indices = @transform_5, window_bounds = array<i64: 4, 128>}]} {
    %c0 = arith.constant 0 : index
    %c0_0 = arith.constant 0 : index
    %0 = vector.load %arg1[%c0, %c0_0] : memref<4x256xbf16, #tpu.memory_space<vmem>>, vector<4x256xbf16>
    %c0_1 = arith.constant 0 : index
    %c0_2 = arith.constant 0 : index
    %1 = vector.load %arg2[%c0_1, %c0_2] : memref<256x128xbf16, #tpu.memory_space<vmem>>, vector<256x128xbf16>
    %cst = arith.constant dense<0.000000e+00> : vector<4x128xf32>
    %2 = tpu.matmul %0, %1, %cst {dimension_numbers = #tpu.dot_dimension_numbers<[1], [0], [0], [1], [0, 0, 1, 1], [], []>} : vector<4x256xbf16>, vector<256x128xbf16>, vector<4x128xf32> -> vector<4x128xf32>
    %c0_3 = arith.constant 0 : index
    %c0_4 = arith.constant 0 : index
    %3 = vector.load %arg3[%c0_3, %c0_4] : memref<1x128xf32, #tpu.memory_space<vmem>>, vector<1x128xf32>
    %4 = vector.broadcast %3 : vector<1x128xf32> to vector<4x128xf32>
    %5 = arith.addf %2, %4 : vector<4x128xf32>
    %cst_5 = arith.constant dense<0.000000e+00> : vector<128xf32>
    %6 = vector.multi_reduction <add>, %5, %cst_5 [0] : vector<4x128xf32> to vector<128xf32>
    %7 = vector.shape_cast %6 : vector<128xf32> to vector<1x128xf32>
    %cst_6 = arith.constant 2.500000e-01 : f32
    %8 = vector.broadcast %cst_6 : f32 to vector<1x128xf32>
    %9 = arith.mulf %7, %8 : vector<1x128xf32>
    %10 = vector.broadcast %9 : vector<1x128xf32> to vector<4x128xf32>
    %11 = arith.subf %5, %10 : vector<4x128xf32>
    %12 = arith.mulf %11, %11 : vector<4x128xf32>
    %cst_7 = arith.constant dense<0.000000e+00> : vector<128xf32>
    %13 = vector.multi_reduction <add>, %12, %cst_7 [0] : vector<4x128xf32> to vector<128xf32>
    %14 = vector.shape_cast %13 : vector<128xf32> to vector<1x128xf32>
    %cst_8 = arith.constant 2.500000e-01 : f32
    %15 = vector.broadcast %cst_8 : f32 to vector<1x128xf32>
    %16 = arith.mulf %14, %15 : vector<1x128xf32>
    %cst_9 = arith.constant 9.99999974E-6 : f32
    %17 = vector.broadcast %cst_9 : f32 to vector<1x128xf32>
    %18 = arith.addf %16, %17 : vector<1x128xf32>
    %19 = math.rsqrt %18 : vector<1x128xf32>
    %c0_10 = arith.constant 0 : index
    %c0_11 = arith.constant 0 : index
    %20 = vector.load %arg4[%c0_10, %c0_11] : memref<1x128xf32, #tpu.memory_space<vmem>>, vector<1x128xf32>
    %21 = vector.broadcast %20 : vector<1x128xf32> to vector<4x128xf32>
    %22 = arith.mulf %21, %11 : vector<4x128xf32>
    %23 = vector.broadcast %19 : vector<1x128xf32> to vector<4x128xf32>
    %24 = arith.mulf %22, %23 : vector<4x128xf32>
    %c0_12 = arith.constant 0 : index
    %c0_13 = arith.constant 0 : index
    %25 = vector.load %arg5[%c0_12, %c0_13] : memref<1x128xf32, #tpu.memory_space<vmem>>, vector<1x128xf32>
    %26 = vector.broadcast %25 : vector<1x128xf32> to vector<4x128xf32>
    %27 = arith.addf %24, %26 : vector<4x128xf32>
    %c0_14 = arith.constant 0 : index
    %c0_15 = arith.constant 0 : index
    %28 = vector.load %arg6[%c0_14, %c0_15] : memref<4x128xf32, #tpu.memory_space<vmem>>, vector<4x128xf32>
    tpu.vector_store %arg6[%c0_14, %c0_15], %27 {strides = array<i32>} : memref<4x128xf32, #tpu.memory_space<vmem>>, vector<4x128xf32>,
    return
  }
  func.func @transform_0(%arg0: i32) -> (i32, i32) {
    %c0_i32 = arith.constant 0 : i32
    %c0_i32_0 = arith.constant 0 : i32
    %c0_i32_1 = arith.constant 0 : i32
    return %c0_i32, %c0_i32_0 : i32, i32
  }
  func.func @transform_1(%arg0: i32) -> (i32, i32) {
    %c0_i32 = arith.constant 0 : i32
    %c0_i32_0 = arith.constant 0 : i32
    %c0_i32_1 = arith.constant 0 : i32
    return %c0_i32, %c0_i32_0 : i32, i32
  }
  func.func @transform_2(%arg0: i32) -> (i32, i32) {
    %c0_i32 = arith.constant 0 : i32
    %c0_i32_0 = arith.constant 0 : i32
    %c0_i32_1 = arith.constant 0 : i32
    return %c0_i32, %c0_i32_0 : i32, i32
  }
  func.func @transform_3(%arg0: i32) -> (i32, i32) {
    %c0_i32 = arith.constant 0 : i32
    %c0_i32_0 = arith.constant 0 : i32
    %c0_i32_1 = arith.constant 0 : i32
    return %c0_i32, %c0_i32_0 : i32, i32
  }
  func.func @transform_4(%arg0: i32) -> (i32, i32) {
    %c0_i32 = arith.constant 0 : i32
    %c0_i32_0 = arith.constant 0 : i32
    %c0_i32_1 = arith.constant 0 : i32
    return %c0_i32, %c0_i32_0 : i32, i32
  }
  func.func @transform_5(%arg0: i32) -> (i32, i32) {
    %c0_i32 = arith.constant 0 : i32
    %c0_i32_0 = arith.constant 0 : i32
    %c0_i32_1 = arith.constant 0 : i32
    return %c0_i32, %c0_i32_0 : i32, i32
  }
}

</mosaic_0001>

<llo_original>
// kernel: encoder_cnn_forward.3
$region0: #{encoder_cnn_forward.3}
  #allocation0 [shape = 'u32[]', space=smem, size = 0x4, offset = 0x4, fixed_abs, tag = 'smem constant byte address 0x4 - core index']
  #allocation1 [shape = 'u32[144,128]{1,0:T(1,128)}', space=vmem, size = 0x12000, scoped, tag = 'internal scratch']
  %s0 = inlined_call_operand.vmem [shape: bf16[4,256], index: 0, kind: input, shape index: {}]
  %s1 = inlined_call_operand.vmem [shape: bf16[256,128], index: 1, kind: input, shape index: {}]
  %s2 = inlined_call_operand.vmem [shape: f32[1,128], index: 2, kind: input, shape index: {}]
  %s3 = inlined_call_operand.vmem [shape: f32[1,128], index: 3, kind: input, shape index: {}]
  %s4 = inlined_call_operand.vmem [shape: f32[1,128], index: 4, kind: input, shape index: {}]
  %s5 = inlined_call_operand.hbm [shape: f32[4,128], index: 5, kind: output, shape index: {}]
  %s6 = sld [smem:[#allocation0]]
  $region30: #{encoder_cnn_forward.3} parent=0
    _
  %s8 = ssub.s32 1, %s6
  %s9 = scalar_select 0, %s8, %s6
  $region1: #{encoder_cnn_forward.3} parent=0
    #allocation2 [shape = 'u8[2048]{0}', space=vmem, size = 0x800, scoped, tag = 'output window, operand 0, single buffered']
    #allocation3 [shape = 's32[1]{0}', space=sflag, size = 0x4, scoped, tag = 'scoped memory for encoder_cnn_forward.3']
    %10 = vsyncpa [#allocation3], 0
    // Predicated region
    $region2: #{encoder_cnn_forward.3} parent=1 // pred_check
      _
    $region3: #{encoder_cnn_forward.3} parent=1 // pred_check_branch
      %12 = sbr.rel (0) target = $region5
    $region4: #{encoder_cnn_forward.3} parent=1 // pred_region
      _
    $region5: #{encoder_cnn_forward.3} parent=1 // pred_fallthru
      _
    // Predicated region
    $region6: #{encoder_cnn_forward.3} parent=1 // pred_check
      _
    $region7: #{encoder_cnn_forward.3} parent=1 // pred_check_branch
      %14 = sbr.rel (0) target = $region9
    $region8: #{encoder_cnn_forward.3} parent=1 // pred_region
      _
    $region9: #{encoder_cnn_forward.3} parent=1 // pred_fallthru
      _
    // Predicated region
    $region10: #{encoder_cnn_forward.3} parent=1 // pred_check
      _
    $region11: #{encoder_cnn_forward.3} parent=1 // pred_check_branch
      %16 = sbr.rel (0) target = $region13
    $region12: #{encoder_cnn_forward.3} parent=1 // pred_region
      _
    $region13: #{encoder_cnn_forward.3} parent=1 // pred_fallthru
      _
    // Predicated region
    $region14: #{encoder_cnn_forward.3} parent=1 // pred_check
      _
    $region15: #{encoder_cnn_forward.3} parent=1 // pred_check_branch
      %18 = sbr.rel (0) target = $region17
    $region16: #{encoder_cnn_forward.3} parent=1 // pred_region
      _
    $region17: #{encoder_cnn_forward.3} parent=1 // pred_fallthru
      _
    // Predicated region
    $region18: #{encoder_cnn_forward.3} parent=1 // pred_check
      _
    $region19: #{encoder_cnn_forward.3} parent=1 // pred_check_branch
      %20 = sbr.rel (0) target = $region21
    $region20: #{encoder_cnn_forward.3} parent=1 // pred_region
      _
    $region21: #{encoder_cnn_forward.3} parent=1 // pred_fallthru
      _
    %v22 = vld [vmem:[%s0] sm:$0xf]
    %v23 = vld [vmem:[%s1] sm:$0xf]
    %v24 = vld [vmem:[%s1 + $0x4] sm:$0xf]
    %v25 = vld [vmem:[%s1 + $0x8] sm:$0xf]
    %v26 = vld [vmem:[%s1 + $0xc] sm:$0xf]
    %v27 = vld [vmem:[%s1 + $0x10] sm:$0xf]
    %v28 = vld [vmem:[%s1 + $0x14] sm:$0xf]
    %v29 = vld [vmem:[%s1 + $0x18] sm:$0xf]
    %v30 = vld [vmem:[%s1 + $0x1c] sm:$0xf]
    %v31 = vld [vmem:[%s1 + $0x20] sm:$0xf]
    %v32 = vld [vmem:[%s1 + $0x24] sm:$0xf]
    %v33 = vld [vmem:[%s1 + $0x28] sm:$0xf]
    %v34 = vld [vmem:[%s1 + $0x2c] sm:$0xf]
    %v35 = vld [vmem:[%s1 + $0x30] sm:$0xf]
    %v36 = vld [vmem:[%s1 + $0x34] sm:$0xf]
    %v37 = vld [vmem:[%s1 + $0x38] sm:$0xf]
    %v38 = vld [vmem:[%s1 + $0x3c] sm:$0xf]
    %v39 = vld [vmem:[%s1 + $0x40] sm:$0xf]
    %v40 = vld [vmem:[%s1 + $0x44] sm:$0xf]
    %v41 = vld [vmem:[%s1 + $0x48] sm:$0xf]
    %v42 = vld [vmem:[%s1 + $0x4c] sm:$0xf]
    %v43 = vld [vmem:[%s1 + $0x50] sm:$0xf]
    %v44 = vld [vmem:[%s1 + $0x54] sm:$0xf]
    %v45 = vld [vmem:[%s1 + $0x58] sm:$0xf]
    %v46 = vld [vmem:[%s1 + $0x5c] sm:$0xf]
    %v47 = vld [vmem:[%s1 + $0x60] sm:$0xf]
    %v48 = vld [vmem:[%s1 + $0x64] sm:$0xf]
    %v49 = vld [vmem:[%s1 + $0x68] sm:$0xf]
    %v50 = vld [vmem:[%s1 + $0x6c] sm:$0xf]
    %v51 = vld [vmem:[%s1 + $0x70] sm:$0xf]
    %v52 = vld [vmem:[%s1 + $0x74] sm:$0xf]
    %v53 = vld [vmem:[%s1 + $0x78] sm:$0xf]
    %v54 = vld [vmem:[%s1 + $0x7c] sm:$0xf]
    %v55 = vld [vmem:[%s2] sm:$0x1]
    %v57 = vlaneseq
    %v58 = vshrl.u32 %v57, 7
    %v59 = vsub.s32 0, %v58
    %v60 = vrot.slane %v55, %v59
    %v64 = vunpack.c.l.s4 1983009808
    %v65 = vunpack.c.0.s8 %v64
    %v66 = vlaneseq
    %v67 = vshrl.u32 %v66, 7
    %v68 = vsub.s32 %v65, %v67
    %v69 = vrot.slane %v22, %v68
    %v70 = vcombine.high %v69, %v69
    %v105 = vunpack.c.l.b16 %v23
    %v106 = vunpack.c.l.b16 %v24
    %v107 = vunpack.c.l.b16 %v25
    %v108 = vunpack.c.l.b16 %v26
    %v109 = vunpack.c.l.b16 %v27
    %v110 = vunpack.c.l.b16 %v28
    %v111 = vunpack.c.l.b16 %v29
    %v112 = vunpack.c.l.b16 %v30
    %v113 = vunpack.c.l.b16 %v31
    %v114 = vunpack.c.l.b16 %v32
    %v115 = vunpack.c.l.b16 %v33
    %v116 = vunpack.c.l.b16 %v34
    %v117 = vunpack.c.l.b16 %v35
    %v118 = vunpack.c.l.b16 %v36
    %v119 = vunpack.c.l.b16 %v37
    %v120 = vunpack.c.l.b16 %v38
    %v121 = vunpack.c.l.b16 %v39
    %v122 = vunpack.c.l.b16 %v40
    %v123 = vunpack.c.l.b16 %v41
    %v124 = vunpack.c.l.b16 %v42
    %v125 = vunpack.c.l.b16 %v43
    %v126 = vunpack.c.l.b16 %v44
    %v127 = vunpack.c.l.b16 %v45
    %v128 = vunpack.c.l.b16 %v46
    %v129 = vunpack.c.l.b16 %v47
    %v130 = vunpack.c.l.b16 %v48
    %v131 = vunpack.c.l.b16 %v49
    %v132 = vunpack.c.l.b16 %v50
    %v133 = vunpack.c.l.b16 %v51
    %v134 = vunpack.c.l.b16 %v52
    %v135 = vunpack.c.l.b16 %v53
    %v136 = vunpack.c.l.b16 %v54
    %v137 = vpack.c.b16 %v106, %v105
    %v138 = vpack.c.b16 %v108, %v107
    %v139 = vpack.c.b16 %v110, %v109
    %v140 = vpack.c.b16 %v112, %v111
    %v141 = vpack.c.b16 %v114, %v113
    %v142 = vpack.c.b16 %v116, %v115
    %v143 = vpack.c.b16 %v118, %v117
    %v144 = vpack.c.b16 %v120, %v119
    %v145 = vpack.c.b16 %v122, %v121
    %v146 = vpack.c.b16 %v124, %v123
    %v147 = vpack.c.b16 %v126, %v125
    %v148 = vpack.c.b16 %v128, %v127
    %v149 = vpack.c.b16 %v130, %v129
    %v150 = vpack.c.b16 %v132, %v131
    %v151 = vpack.c.b16 %v134, %v133
    %v152 = vpack.c.b16 %v136, %v135
    %169 = vmatprep.subr.bf16.mxu0 0
    %170 = vmatpush1.bf16.msra.mxu0 %v137
    %171 = vmatprep.subr.bf16.mxu0 0
    %172 = vmatpush1.bf16.msra.mxu0 %v138
    %173 = vmatprep.subr.bf16.mxu0 0
    %174 = vmatpush1.bf16.msra.mxu0 %v139
    %175 = vmatprep.subr.bf16.mxu0 0
    %176 = vmatpush1.bf16.msra.mxu0 %v140
    %177 = vmatprep.subr.bf16.mxu0 0
    %178 = vmatpush1.bf16.msra.mxu0 %v141
    %179 = vmatprep.subr.bf16.mxu0 0
    %180 = vmatpush1.bf16.msra.mxu0 %v142
    %181 = vmatprep.subr.bf16.mxu0 0
    %182 = vmatpush1.bf16.msra.mxu0 %v143
    %183 = vmatprep.subr.bf16.mxu0 0
    %184 = vmatpush1.bf16.msra.mxu0 %v144
    %185 = vmatprep.subr.bf16.mxu0 0
    %186 = vmatpush1.bf16.msra.mxu0 %v145
    %187 = vmatprep.subr.bf16.mxu0 0
    %188 = vmatpush1.bf16.msra.mxu0 %v146
    %189 = vmatprep.subr.bf16.mxu0 0
    %190 = vmatpush1.bf16.msra.mxu0 %v147
    %191 = vmatprep.subr.bf16.mxu0 0
    %192 = vmatpush1.bf16.msra.mxu0 %v148
    %193 = vmatprep.subr.bf16.mxu0 0
    %194 = vmatpush1.bf16.msra.mxu0 %v149
    %195 = vmatprep.subr.bf16.mxu0 0
    %196 = vmatpush1.bf16.msra.mxu0 %v150
    %197 = vmatprep.subr.bf16.mxu0 0
    %198 = vmatpush1.bf16.msra.mxu0 %v151
    %199 = vmatprep.subr.bf16.mxu0 0
    %200 = vmatpush1.bf16.msra.mxu0 %v152
    %201 = vmatprep.mubr.bf16.mxu0 %v70
    %202 = vmatmul.mubr.bf16.gmra.mrb[0].mxu0 %v69
    %v203 = vpop.f32.mrb[0].mxu0
    %v204 = vadd.f32 %v60, %v203
    %v205 = vpop.f32.mrb[0].mxu0
    %v206 = vpop.f32.mrb[0].mxu0
    %v207 = vpop.f32.mrb[0].mxu0
    %208 = vdwg.mxu0
    %vm209 = vcmask 1043456
    %v210 = vsel %vm209, %v204, 0.0
    %v211 = vrot.slane %v210, 4
    %v212 = vadd.f32 %v210, %v211
    %v213 = vrot.slane %v212, 2
    %v214 = vadd.f32 %v212, %v213
    %v215 = vrot.slane %v214, 1
    %v216 = vadd.f32 %v214, %v215
    %v217 = vmul.f32 %v216, 0.25
    %v218 = vsub.f32 %v204, %v217
    %v219 = vmul.f32 %v218, %v218
    %v220 = vsel %vm209, %v219, 0.0
    %v221 = vrot.slane %v220, 4
    %v222 = vadd.f32 %v220, %v221
    %v223 = vrot.slane %v222, 2
    %v224 = vadd.f32 %v222, %v223
    %v225 = vrot.slane %v224, 1
    %v226 = vadd.f32 %v224, %v225
    %v227 = vmul.f32 %v226, 0.25
    %v228 = vadd.f32 %v227, 1e-05
    %v229 = vrsqrt.pop %v228
    %v230 = vld [vmem:[%s3] sm:$0x1]
    %v232 = vlaneseq
    %v233 = vshrl.u32 %v232, 7
    %v234 = vsub.s32 0, %v233
    %v235 = vrot.slane %v230, %v234
    %v237 = vmul.f32 %v235, %v218
    %v238 = vmul.f32 %v237, %v229
    %v239 = vld [vmem:[%s4] sm:$0x1]
    %v241 = vlaneseq
    %v242 = vshrl.u32 %v241, 7
    %v243 = vsub.s32 0, %v242
    %v244 = vrot.slane %v239, %v243
    %v246 = vadd.f32 %v238, %v244
    %247 = vst [vmem:[#allocation2] sm:$0xf] %v246
    // Predicated region
    $region22: #{encoder_cnn_forward.3} parent=1 // pred_check
      _
    $region23: #{encoder_cnn_forward.3} parent=1 // pred_check_branch
      %249 = sbr.rel (0) target = $region25
    $region24: #{encoder_cnn_forward.3} parent=1 // pred_region
      %s251 = ssub.s32 64, 64
      %252 = vsyncadd [#allocation3], %s251
      %s254 = sshll.u32 [#allocation2], 4
      %s255 = int_to_ptr.vmem [resolvable:$true] %s254
      %257 = dma.vmem_to_hbm [thread:$0]  %s255, 64, %s5, [#allocation3]
    $region25: #{encoder_cnn_forward.3} parent=1 // pred_fallthru
      _
    // Predicated region
    $region26: #{encoder_cnn_forward.3} parent=1 // pred_check
      _
    $region27: #{encoder_cnn_forward.3} parent=1 // pred_check_branch
      %259 = sbr.rel (0) target = $region29
    $region28: #{encoder_cnn_forward.3} parent=1 // pred_region
      %260 = dma.done [#allocation3], 64
    $region29: #{encoder_cnn_forward.3} parent=1 // pred_fallthru
      _
    %261 = vsyncpa [#allocation3], 1

// kernel: encoder_cnn_forward.2
$region0: #{encoder_cnn_forward.2}
  #allocation0 [shape = 'u32[]', space=smem, size = 0x4, offset = 0x4, fixed_abs, tag = 'smem constant byte address 0x4 - core index']
  #allocation1 [shape = 'u32[144,128]{1,0:T(1,128)}', space=vmem, size = 0x12000, scoped, tag = 'internal scratch']
  %s0 = inlined_call_operand.vmem [shape: bf16[4,256,32], index: 0, kind: input, shape index: {}]
  %s1 = inlined_call_operand.vmem [shape: bf16[32,256], index: 1, kind: input, shape index: {}]
  %s2 = inlined_call_operand.vmem [shape: f32[1,256], index: 2, kind: input, shape index: {}]
  %s3 = inlined_call_operand.vmem [shape: bf16[2,2,256], index: 3, kind: output, shape index: {}]
  %s4 = sld [smem:[#allocation0]]
  $region45: #{encoder_cnn_forward.2} parent=0
    _
  %s6 = ssub.s32 1, %s4
  %s7 = scalar_select 0, %s6, %s4
  loop: start=0, step=1, limit=4
  $region2: #{encoder_cnn_forward.2} parent=0 // loop_pre_header
    _
  $region3: #{encoder_cnn_forward.2} parent=0 // loop_header
    %s9 = sphi 0, %s13
    %p10 = scmp.ge.s32.totalorder %s9, 4
    %s19 = sphi 0, %s21
    %s22 = sphi 0, %s19
    %s23 = sphi 0, %s22
    %s39 = sphi 0, %s23
    %s43 = sphi 0, %s43
    %s45 = sphi 0, %s43
    %s46 = sphi 0, %s45
    %s60 = sphi 0, %s46
    %s64 = sphi 0, %s64
    %s66 = sphi 0, %s64
    %s67 = sphi 0, %s66
    %s81 = sphi 0, %s67
    %s87 = sphi 0, %s89
    %s90 = sphi 0, %s87
    %s91 = sphi 0, %s90
    %s107 = sphi 0, %s91
  $region4: #{encoder_cnn_forward.2} parent=0 // loop_header_branch
    %12 = sbr.rel (%p10) target = $region8
  $region5: #{encoder_cnn_forward.2} parent=0 // loop_body
    %s14 = ssub.s32 %s9, 1
    %s15 = ssub.s32 %s9, 2
    %s16 = sadd.s32 %s9, 1
    %s17 = ssub.s32 %s9, %s16
    %p18 = scmp.eq.s32.totalorder %s17, 0
    %s20 = sadd.s32 %s19, 1
    %s21 = scalar_select %p18, %s19, %s20
    %p24 = pneg %p18
    %p25 = scmp.eq.s32.totalorder %s9, 1
    %p26 = por %p24, %p25
    %p27 = scmp.ne.s32.totalorder %s19, %s22
    %p28 = scmp.eq.s32.totalorder %s9, 0
    %p29 = por %p27, %p28
    %p30 = scmp.ne.s32.totalorder %s19, %s22
    %p31 = scmp.eq.s32.totalorder %s14, 1
    %p32 = por %p30, %p31
    %p33 = scmp.ne.s32.totalorder %s22, %s23
    %p34 = scmp.eq.s32.totalorder %s14, 0
    %p35 = por %p33, %p34
    %p36 = scmp.ne.s32.totalorder %s22, %s23
    %p37 = scmp.eq.s32.totalorder %s15, 1
    %p38 = por %p36, %p37
    %p40 = scmp.ne.s32.totalorder %s23, %s39
    %p41 = scmp.eq.s32.totalorder %s15, 0
    %p42 = por %p40, %p41
    %s44 = sadd.s32 %s43, 1
    %p47 = scmp.eq.s32.totalorder %s9, 1
    %p48 = scmp.ne.s32.totalorder %s43, %s45
    %p49 = scmp.eq.s32.totalorder %s9, 0
    %p50 = por %p48, %p49
    %p51 = scmp.ne.s32.totalorder %s43, %s45
    %p52 = scmp.eq.s32.totalorder %s14, 1
    %p53 = por %p51, %p52
    %p54 = scmp.ne.s32.totalorder %s45, %s46
    %p55 = scmp.eq.s32.totalorder %s14, 0
    %p56 = por %p54, %p55
    %p57 = scmp.ne.s32.totalorder %s45, %s46
    %p58 = scmp.eq.s32.totalorder %s15, 1
    %p59 = por %p57, %p58
    %p61 = scmp.ne.s32.totalorder %s46, %s60
    %p62 = scmp.eq.s32.totalorder %s15, 0
    %p63 = por %p61, %p62
    %s65 = sadd.s32 %s64, 1
    %p68 = scmp.eq.s32.totalorder %s9, 1
    %p69 = scmp.ne.s32.totalorder %s64, %s66
    %p70 = scmp.eq.s32.totalorder %s9, 0
    %p71 = por %p69, %p70
    %p72 = scmp.ne.s32.totalorder %s64, %s66
    %p73 = scmp.eq.s32.totalorder %s14, 1
    %p74 = por %p72, %p73
    %p75 = scmp.ne.s32.totalorder %s66, %s67
    %p76 = scmp.eq.s32.totalorder %s14, 0
    %p77 = por %p75, %p76
    %p78 = scmp.ne.s32.totalorder %s66, %s67
    %p79 = scmp.eq.s32.totalorder %s15, 1
    %p80 = por %p78, %p79
    %p82 = scmp.ne.s32.totalorder %s67, %s81
    %p83 = scmp.eq.s32.totalorder %s15, 0
    %p84 = por %p82, %p83
    %s85 = ssub.s32 %s9, %s16
    %p86 = scmp.eq.s32.totalorder %s85, 0
    %s88 = sadd.s32 %s87, 1
    %s89 = scalar_select %p86, %s87, %s88
    %p92 = pneg %p86
    %p93 = scmp.eq.s32.totalorder %s9, 1
    %p94 = por %p92, %p93
    %p95 = scmp.ne.s32.totalorder %s87, %s90
    %p96 = scmp.eq.s32.totalorder %s9, 0
    %p97 = por %p95, %p96
    %p98 = scmp.ne.s32.totalorder %s87, %s90
    %p99 = scmp.eq.s32.totalorder %s14, 1
    %p100 = por %p98, %p99
    %p101 = scmp.ne.s32.totalorder %s90, %s91
    %p102 = scmp.eq.s32.totalorder %s14, 0
    %p103 = por %p101, %p102
    %p104 = scmp.ne.s32.totalorder %s90, %s91
    %p105 = scmp.eq.s32.totalorder %s15, 1
    %p106 = por %p104, %p105
    %p108 = scmp.ne.s32.totalorder %s91, %s107
    %p109 = scmp.eq.s32.totalorder %s15, 0
    %p110 = por %p108, %p109
    %p111 = scmp.le.s32.totalorder 1, %s9
    %p112 = scmp.lt.s32.totalorder %s9, 3
    %p113 = pnand %p111, %p112
    %p114 = pneg %p113
    // Predicated region
    $region9: #{encoder_cnn_forward.2} parent=5 // pred_check
      _
    $region10: #{encoder_cnn_forward.2} parent=5 // pred_check_branch
      %116 = sbr.rel (%p113) target = $region12
    $region11: #{encoder_cnn_forward.2} parent=5 // pred_region
      %s117 = ssub.s32 %s9, 1
      // Predicated region
      $region13: #{encoder_cnn_forward.2} parent=11 // pred_check
        %p118 = pneg %p56
      $region14: #{encoder_cnn_forward.2} parent=11 // pred_check_branch
        %120 = sbr.rel (%p118) target = $region16
      $region15: #{encoder_cnn_forward.2} parent=11 // pred_region
        _
      $region16: #{encoder_cnn_forward.2} parent=11 // pred_fallthru
        _
      // Predicated region
      $region17: #{encoder_cnn_forward.2} parent=11 // pred_check
        %p121 = pneg %p77
      $region18: #{encoder_cnn_forward.2} parent=11 // pred_check_branch
        %123 = sbr.rel (%p121) target = $region20
      $region19: #{encoder_cnn_forward.2} parent=11 // pred_region
        _
      $region20: #{encoder_cnn_forward.2} parent=11 // pred_fallthru
        _
    $region12: #{encoder_cnn_forward.2} parent=5 // pred_fallthru
      _
    %p124 = scmp.lt.s32.totalorder %s9, 2
    // Predicated region
    $region21: #{encoder_cnn_forward.2} parent=5 // pred_check
      %p125 = pneg %p124
    $region22: #{encoder_cnn_forward.2} parent=5 // pred_check_branch
      %127 = sbr.rel (%p125) target = $region24
    $region23: #{encoder_cnn_forward.2} parent=5 // pred_region
      // Predicated region
      $region25: #{encoder_cnn_forward.2} parent=23 // pred_check
        %p128 = pneg %p29
      $region26: #{encoder_cnn_forward.2} parent=23 // pred_check_branch
        %130 = sbr.rel (%p128) target = $region28
      $region27: #{encoder_cnn_forward.2} parent=23 // pred_region
        %s131 = smul.u32 2, %s9
        %p132 = scmp.lt.s32.totalorder %s131, 3
        %s133 = scalar_select %p132, %s131, 3
        %s134 = smul.addr %s133, 32
        %s135 = smul.addr %s134, 4
        %s136 = scalar_lea.vmem %s0, %s135
        %s137 = smul.u32 2, %s9
      $region28: #{encoder_cnn_forward.2} parent=23 // pred_fallthru
        _
    $region24: #{encoder_cnn_forward.2} parent=5 // pred_fallthru
      _
    %p138 = scmp.le.s32.totalorder 1, %s9
    %p139 = scmp.lt.s32.totalorder %s9, 3
    %p140 = pnand %p138, %p139
    %p141 = pneg %p140
    // Predicated region
    $region29: #{encoder_cnn_forward.2} parent=5 // pred_check
      _
    $region30: #{encoder_cnn_forward.2} parent=5 // pred_check_branch
      %143 = sbr.rel (%p140) target = $region32
    $region31: #{encoder_cnn_forward.2} parent=5 // pred_region
      %s144 = ssub.s32 %s9, 1
      %s145 = smul.u32 2, %s14
      %p146 = scmp.lt.s32.totalorder %s145, 3
      %s147 = scalar_select %p146, %s145, 3
      %s148 = smul.addr %s147, 32
      %s149 = smul.addr %s148, 4
      %s150 = scalar_lea.vmem %s0, %s149
      %p151 = pneg %p35
      %p152 = pneg %p32
      %p153 = pneg %p56
      %p154 = pneg %p53
      %p155 = pneg %p77
      %p156 = pneg %p74
      %p157 = pneg %p103
      %p158 = pneg %p100
      %p159 = scmp.lt.s32.totalorder %s14, 1
      %s160 = scalar_select %p159, %s14, 1
      %s161 = smul.addr %s160, 2
      %s162 = scalar_lea.vmem %s3, %s161
      %s163 = smul.u32 2, %s14
      %p164 = scmp.lt.s32.totalorder %s163, 3
      %s165 = scalar_select %p164, %s163, 3
      %s166 = smul.addr %s165, 32
      %s167 = smul.addr %s166, 4
      %s168 = scalar_lea.vmem %s0, %s167
      %s169 = smul.u32 2, %s14
      %p170 = scmp.lt.s32.totalorder %s14, 1
      %s171 = scalar_select %p170, %s14, 1
      %s172 = smul.addr %s171, 2
      %s173 = scalar_lea.vmem %s3, %s172
      %v175 = vld [vmem:[%s168] sm:$0xf]
      %v176 = vld [vmem:[%s168 + $0x4] sm:$0xf]
      %v177 = vld [vmem:[%s168 + $0x8] sm:$0xf]
      %v178 = vld [vmem:[%s168 + $0xc] sm:$0xf]
      %v179 = vld [vmem:[%s168 + $0x10] sm:$0xf]
      %v180 = vld [vmem:[%s168 + $0x14] sm:$0xf]
      %v181 = vld [vmem:[%s168 + $0x18] sm:$0xf]
      %v182 = vld [vmem:[%s168 + $0x1c] sm:$0xf]
      %v183 = vld [vmem:[%s168 + $0x20] sm:$0xf]
      %v184 = vld [vmem:[%s168 + $0x24] sm:$0xf]
      %v185 = vld [vmem:[%s168 + $0x28] sm:$0xf]
      %v186 = vld [vmem:[%s168 + $0x2c] sm:$0xf]
      %v187 = vld [vmem:[%s168 + $0x30] sm:$0xf]
      %v188 = vld [vmem:[%s168 + $0x34] sm:$0xf]
      %v189 = vld [vmem:[%s168 + $0x38] sm:$0xf]
      %v190 = vld [vmem:[%s168 + $0x3c] sm:$0xf]
      %v191 = vld [vmem:[%s168 + $0x40] sm:$0xf]
      %v192 = vld [vmem:[%s168 + $0x44] sm:$0xf]
      %v193 = vld [vmem:[%s168 + $0x48] sm:$0xf]
      %v194 = vld [vmem:[%s168 + $0x4c] sm:$0xf]
      %v195 = vld [vmem:[%s168 + $0x50] sm:$0xf]
      %v196 = vld [vmem:[%s168 + $0x54] sm:$0xf]
      %v197 = vld [vmem:[%s168 + $0x58] sm:$0xf]
      %v198 = vld [vmem:[%s168 + $0x5c] sm:$0xf]
      %v199 = vld [vmem:[%s168 + $0x60] sm:$0xf]
      %v200 = vld [vmem:[%s168 + $0x64] sm:$0xf]
      %v201 = vld [vmem:[%s168 + $0x68] sm:$0xf]
      %v202 = vld [vmem:[%s168 + $0x6c] sm:$0xf]
      %v203 = vld [vmem:[%s168 + $0x70] sm:$0xf]
      %v204 = vld [vmem:[%s168 + $0x74] sm:$0xf]
      %v205 = vld [vmem:[%s168 + $0x78] sm:$0xf]
      %v206 = vld [vmem:[%s168 + $0x7c] sm:$0xf]
      %v207 = vld [vmem:[%s168 + $0x80] sm:$0xf]
      %v208 = vld [vmem:[%s168 + $0x84] sm:$0xf]
      %v209 = vld [vmem:[%s168 + $0x88] sm:$0xf]
      %v210 = vld [vmem:[%s168 + $0x8c] sm:$0xf]
      %v211 = vld [vmem:[%s168 + $0x90] sm:$0xf]
      %v212 = vld [vmem:[%s168 + $0x94] sm:$0xf]
      %v213 = vld [vmem:[%s168 + $0x98] sm:$0xf]
      %v214 = vld [vmem:[%s168 + $0x9c] sm:$0xf]
      %v215 = vld [vmem:[%s168 + $0xa0] sm:$0xf]
      %v216 = vld [vmem:[%s168 + $0xa4] sm:$0xf]
      %v217 = vld [vmem:[%s168 + $0xa8] sm:$0xf]
      %v218 = vld [vmem:[%s168 + $0xac] sm:$0xf]
      %v219 = vld [vmem:[%s168 + $0xb0] sm:$0xf]
      %v220 = vld [vmem:[%s168 + $0xb4] sm:$0xf]
      %v221 = vld [vmem:[%s168 + $0xb8] sm:$0xf]
      %v222 = vld [vmem:[%s168 + $0xbc] sm:$0xf]
      %v223 = vld [vmem:[%s168 + $0xc0] sm:$0xf]
      %v224 = vld [vmem:[%s168 + $0xc4] sm:$0xf]
      %v225 = vld [vmem:[%s168 + $0xc8] sm:$0xf]
      %v226 = vld [vmem:[%s168 + $0xcc] sm:$0xf]
      %v227 = vld [vmem:[%s168 + $0xd0] sm:$0xf]
      %v228 = vld [vmem:[%s168 + $0xd4] sm:$0xf]
      %v229 = vld [vmem:[%s168 + $0xd8] sm:$0xf]
      %v230 = vld [vmem:[%s168 + $0xdc] sm:$0xf]
      %v231 = vld [vmem:[%s168 + $0xe0] sm:$0xf]
      %v232 = vld [vmem:[%s168 + $0xe4] sm:$0xf]
      %v233 = vld [vmem:[%s168 + $0xe8] sm:$0xf]
      %v234 = vld [vmem:[%s168 + $0xec] sm:$0xf]
      %v235 = vld [vmem:[%s168 + $0xf0] sm:$0xf]
      %v236 = vld [vmem:[%s168 + $0xf4] sm:$0xf]
      %v237 = vld [vmem:[%s168 + $0xf8] sm:$0xf]
      %v238 = vld [vmem:[%s168 + $0xfc] sm:$0xf]
      %v239 = vld [vmem:[%s1] sm:$0xff]
      %v240 = vld [vmem:[%s1 + $0x8] sm:$0xff]
      %v241 = vld [vmem:[%s1 + $0x10] sm:$0xff]
      %v242 = vld [vmem:[%s1 + $0x18] sm:$0xff]
      %v243 = vld [vmem:[%s2] sm:$0x3]
      %v245 = vlaneseq
      %v246 = vshrl.u32 %v245, 7
      %v247 = vsub.s32 0, %v246
      %v248 = vrot.slane %v243, %v247
      %v249 = vlaneseq
      %v250 = vshrl.u32 %v249, 7
      %v251 = vsub.s32 1, %v250
      %v252 = vrot.slane %v243, %v251
      %v319 = vunpack.c.l.b16 %v175
      %v320 = vunpack.c.l.b16 %v176
      %v321 = vunpack.c.l.b16 %v177
      %v322 = vunpack.c.l.b16 %v178
      %v323 = vunpack.c.l.b16 %v179
      %v324 = vunpack.c.l.b16 %v180
      %v325 = vunpack.c.l.b16 %v181
      %v326 = vunpack.c.l.b16 %v182
      %v327 = vunpack.c.l.b16 %v183
      %v328 = vunpack.c.l.b16 %v184
      %v329 = vunpack.c.l.b16 %v185
      %v330 = vunpack.c.l.b16 %v186
      %v331 = vunpack.c.l.b16 %v187
      %v332 = vunpack.c.l.b16 %v188
      %v333 = vunpack.c.l.b16 %v189
      %v334 = vunpack.c.l.b16 %v190
      %v335 = vunpack.c.l.b16 %v191
      %v336 = vunpack.c.l.b16 %v192
      %v337 = vunpack.c.l.b16 %v193
      %v338 = vunpack.c.l.b16 %v194
      %v339 = vunpack.c.l.b16 %v195
      %v340 = vunpack.c.l.b16 %v196
      %v341 = vunpack.c.l.b16 %v197
      %v342 = vunpack.c.l.b16 %v198
      %v343 = vunpack.c.l.b16 %v199
      %v344 = vunpack.c.l.b16 %v200
      %v345 = vunpack.c.l.b16 %v201
      %v346 = vunpack.c.l.b16 %v202
      %v347 = vunpack.c.l.b16 %v203
      %v348 = vunpack.c.l.b16 %v204
      %v349 = vunpack.c.l.b16 %v205
      %v350 = vunpack.c.l.b16 %v206
      %v351 = vunpack.c.l.b16 %v207
      %v352 = vunpack.c.l.b16 %v208
      %v353 = vunpack.c.l.b16 %v209
      %v354 = vunpack.c.l.b16 %v210
      %v355 = vunpack.c.l.b16 %v211
      %v356 = vunpack.c.l.b16 %v212
      %v357 = vunpack.c.l.b16 %v213
      %v358 = vunpack.c.l.b16 %v214
      %v359 = vunpack.c.l.b16 %v215
      %v360 = vunpack.c.l.b16 %v216
      %v361 = vunpack.c.l.b16 %v217
      %v362 = vunpack.c.l.b16 %v218
      %v363 = vunpack.c.l.b16 %v219
      %v364 = vunpack.c.l.b16 %v220
      %v365 = vunpack.c.l.b16 %v221
      %v366 = vunpack.c.l.b16 %v222
      %v367 = vunpack.c.l.b16 %v223
      %v368 = vunpack.c.l.b16 %v224
      %v369 = vunpack.c.l.b16 %v225
      %v370 = vunpack.c.l.b16 %v226
      %v371 = vunpack.c.l.b16 %v227
      %v372 = vunpack.c.l.b16 %v228
      %v373 = vunpack.c.l.b16 %v229
      %v374 = vunpack.c.l.b16 %v230
      %v375 = vunpack.c.l.b16 %v231
      %v376 = vunpack.c.l.b16 %v232
      %v377 = vunpack.c.l.b16 %v233
      %v378 = vunpack.c.l.b16 %v234
      %v379 = vunpack.c.l.b16 %v235
      %v380 = vunpack.c.l.b16 %v236
      %v381 = vunpack.c.l.b16 %v237
      %v382 = vunpack.c.l.b16 %v238
      %v383 = vpack.c.b16 %v320, %v319
      %v384 = vpack.c.b16 %v322, %v321
      %v385 = vpack.c.b16 %v324, %v323
      %v386 = vpack.c.b16 %v326, %v325
      %v387 = vpack.c.b16 %v328, %v327
      %v388 = vpack.c.b16 %v330, %v329
      %v389 = vpack.c.b16 %v332, %v331
      %v390 = vpack.c.b16 %v334, %v333
      %v391 = vpack.c.b16 %v336, %v335
      %v392 = vpack.c.b16 %v338, %v337
      %v393 = vpack.c.b16 %v340, %v339
      %v394 = vpack.c.b16 %v342, %v341
      %v395 = vpack.c.b16 %v344, %v343
      %v396 = vpack.c.b16 %v346, %v345
      %v397 = vpack.c.b16 %v348, %v347
      %v398 = vpack.c.b16 %v350, %v349
      %v399 = vpack.c.b16 %v352, %v351
      %v400 = vpack.c.b16 %v354, %v353
      %v401 = vpack.c.b16 %v356, %v355
      %v402 = vpack.c.b16 %v358, %v357
      %v403 = vpack.c.b16 %v360, %v359
      %v404 = vpack.c.b16 %v362, %v361
      %v405 = vpack.c.b16 %v364, %v363
      %v406 = vpack.c.b16 %v366, %v365
      %v407 = vpack.c.b16 %v368, %v367
      %v408 = vpack.c.b16 %v370, %v369
      %v409 = vpack.c.b16 %v372, %v371
      %v410 = vpack.c.b16 %v374, %v373
      %v411 = vpack.c.b16 %v376, %v375
      %v412 = vpack.c.b16 %v378, %v377
      %v413 = vpack.c.b16 %v380, %v379
      %v414 = vpack.c.b16 %v382, %v381
      %v419 = vunpack.c.l.b16 %v239
      %v420 = vunpack.c.h.b16 %v239
      %v421 = vunpack.c.l.b16 %v240
      %v422 = vunpack.c.h.b16 %v240
      %v423 = vunpack.c.l.b16 %v241
      %v424 = vunpack.c.h.b16 %v241
      %v425 = vunpack.c.l.b16 %v242
      %v426 = vunpack.c.h.b16 %v242
      %v427 = vpack.c.b16 %v421, %v419
      %v428 = vpack.c.b16 %v422, %v420
      %v429 = vpack.c.b16 %v425, %v423
      %v430 = vpack.c.b16 %v426, %v424
      %vm435 = vcmask 261120
      %v437 = vsel %vm435, %v383, 0
      %v440 = vsel %vm435, %v384, 0
      %v443 = vsel %vm435, %v385, 0
      %v446 = vsel %vm435, %v386, 0
      %v449 = vsel %vm435, %v387, 0
      %v452 = vsel %vm435, %v388, 0
      %v455 = vsel %vm435, %v389, 0
      %v458 = vsel %vm435, %v390, 0
      %v461 = vsel %vm435, %v391, 0
      %v464 = vsel %vm435, %v392, 0
      %v467 = vsel %vm435, %v393, 0
      %v470 = vsel %vm435, %v394, 0
      %v473 = vsel %vm435, %v395, 0
      %v476 = vsel %vm435, %v396, 0
      %v479 = vsel %vm435, %v397, 0
      %v482 = vsel %vm435, %v398, 0
      %v485 = vsel %vm435, %v399, 0
      %v488 = vsel %vm435, %v400, 0
      %v491 = vsel %vm435, %v401, 0
      %v494 = vsel %vm435, %v402, 0
      %v497 = vsel %vm435, %v403, 0
      %v500 = vsel %vm435, %v404, 0
      %v503 = vsel %vm435, %v405, 0
      %v506 = vsel %vm435, %v406, 0
      %v509 = vsel %vm435, %v407, 0
      %v512 = vsel %vm435, %v408, 0
      %v515 = vsel %vm435, %v409, 0
      %v518 = vsel %vm435, %v410, 0
      %v521 = vsel %vm435, %v411, 0
      %v524 = vsel %vm435, %v412, 0
      %v527 = vsel %vm435, %v413, 0
      %v530 = vsel %vm435, %v414, 0
      %532 = vmatprep.subr.bf16.mxu0 %v428
      %533 = vmatpush1.bf16.msra.mxu0 %v427
      %534 = vmatprep.subr.bf16.mxu0 %v430
      %535 = vmatpush1.bf16.msra.mxu0 %v429
      %536 = vmatprep.subr.bf16.mxu0 0
      %537 = vmatpush1.bf16.msra.mxu0 0
      %538 = vmatprep.subr.bf16.mxu0 0
      %539 = vmatpush1.bf16.msra.mxu0 0
      %540 = vmatprep.subr.bf16.mxu0 0
      %541 = vmatpush1.bf16.msra.mxu0 0
      %542 = vmatprep.subr.bf16.mxu0 0
      %543 = vmatpush1.bf16.msra.mxu0 0
      %544 = vmatprep.subr.bf16.mxu0 0
      %545 = vmatpush1.bf16.msra.mxu0 0
      %546 = vmatprep.subr.bf16.mxu0 0
      %547 = vmatpush1.bf16.msra.mxu0 0
      %548 = vmatprep.subr.bf16.mxu0 0
      %549 = vmatpush1.bf16.msra.mxu0 0
      %550 = vmatprep.subr.bf16.mxu0 0
      %551 = vmatpush1.bf16.msra.mxu0 0
      %552 = vmatprep.subr.bf16.mxu0 0
      %553 = vmatpush1.bf16.msra.mxu0 0
      %554 = vmatprep.subr.bf16.mxu0 0
      %555 = vmatpush1.bf16.msra.mxu0 0
      %556 = vmatprep.subr.bf16.mxu0 0
      %557 = vmatpush1.bf16.msra.mxu0 0
      %558 = vmatprep.subr.bf16.mxu0 0
      %559 = vmatpush1.bf16.msra.mxu0 0
      %560 = vmatprep.subr.bf16.mxu0 0
      %561 = vmatpush1.bf16.msra.mxu0 0
      %562 = vmatprep.subr.bf16.mxu0 0
      %563 = vmatpush1.bf16.msra.mxu0 0
      %564 = vmatprep.mubr.bf16.mxu0 0
      %565 = vmatmul.mubr.bf16.gmra.mrb[0].mxu0 %v437
      %v566 = vpop.f32.mrb[0].mxu0
      %v567 = vadd.f32 %v248, %v566
      %v568 = vpop.f32.mrb[0].mxu0
      %v569 = vadd.f32 %v252, %v568
      %v570 = vpop.f32.mrb[0].mxu0
      %v571 = vadd.f32 %v248, %v570
      %v572 = vpop.f32.mrb[0].mxu0
      %v573 = vadd.f32 %v252, %v572
      %574 = vmatprep.mubr.bf16.mxu0 0
      %575 = vmatmul.mubr.bf16.gmra.mrb[0].mxu0 %v440
      %v576 = vpop.f32.mrb[0].mxu0
      %v577 = vadd.f32 %v248, %v576
      %v578 = vpop.f32.mrb[0].mxu0
      %v579 = vadd.f32 %v252, %v578
      %v580 = vpop.f32.mrb[0].mxu0
      %v581 = vadd.f32 %v248, %v580
      %v582 = vpop.f32.mrb[0].mxu0
      %v583 = vadd.f32 %v252, %v582
      %584 = vmatprep.mubr.bf16.mxu0 0
      %585 = vmatmul.mubr.bf16.gmra.mrb[0].mxu0 %v443
      %v586 = vpop.f32.mrb[0].mxu0
      %v587 = vadd.f32 %v248, %v586
      %v588 = vpop.f32.mrb[0].mxu0
      %v589 = vadd.f32 %v252, %v588
      %v590 = vpop.f32.mrb[0].mxu0
      %v591 = vadd.f32 %v248, %v590
      %v592 = vpop.f32.mrb[0].mxu0
      %v593 = vadd.f32 %v252, %v592
      %594 = vmatprep.mubr.bf16.mxu0 0
      %595 = vmatmul.mubr.bf16.gmra.mrb[0].mxu0 %v446
      %v596 = vpop.f32.mrb[0].mxu0
      %v597 = vadd.f32 %v248, %v596
      %v598 = vpop.f32.mrb[0].mxu0
      %v599 = vadd.f32 %v252, %v598
      %v600 = vpop.f32.mrb[0].mxu0
      %v601 = vadd.f32 %v248, %v600
      %v602 = vpop.f32.mrb[0].mxu0
      %v603 = vadd.f32 %v252, %v602
      %604 = vmatprep.mubr.bf16.mxu0 0
      %605 = vmatmul.mubr.bf16.gmra.mrb[0].mxu0 %v449
      %v606 = vpop.f32.mrb[0].mxu0
      %v607 = vadd.f32 %v248, %v606
      %v608 = vpop.f32.mrb[0].mxu0
      %v609 = vadd.f32 %v252, %v608
      %v610 = vpop.f32.mrb[0].mxu0
      %v611 = vadd.f32 %v248, %v610
      %v612 = vpop.f32.mrb[0].mxu0
      %v613 = vadd.f32 %v252, %v612
      %614 = vmatprep.mubr.bf16.mxu0 0
      %615 = vmatmul.mubr.bf16.gmra.mrb[0].mxu0 %v452
      %v616 = vpop.f32.mrb[0].mxu0
      %v617 = vadd.f32 %v248, %v616
      %v618 = vpop.f32.mrb[0].mxu0
      %v619 = vadd.f32 %v252, %v618
      %v620 = vpop.f32.mrb[0].mxu0
      %v621 = vadd.f32 %v248, %v620
      %v622 = vpop.f32.mrb[0].mxu0
      %v623 = vadd.f32 %v252, %v622
      %624 = vmatprep.mubr.bf16.mxu0 0
      %625 = vmatmul.mubr.bf16.gmra.mrb[0].mxu0 %v455
      %v626 = vpop.f32.mrb[0].mxu0
      %v627 = vadd.f32 %v248, %v626
      %v628 = vpop.f32.mrb[0].mxu0
      %v629 = vadd.f32 %v252, %v628
      %v630 = vpop.f32.mrb[0].mxu0
      %v631 = vadd.f32 %v248, %v630
      %v632 = vpop.f32.mrb[0].mxu0
      %v633 = vadd.f32 %v252, %v632
      %634 = vmatprep.mubr.bf16.mxu0 0
      %635 = vmatmul.mubr.bf16.gmra.mrb[0].mxu0 %v458
      %v636 = vpop.f32.mrb[0].mxu0
      %v637 = vadd.f32 %v248, %v636
      %v638 = vpop.f32.mrb[0].mxu0
      %v639 = vadd.f32 %v252, %v638
      %v640 = vpop.f32.mrb[0].mxu0
      %v641 = vadd.f32 %v248, %v640
      %v642 = vpop.f32.mrb[0].mxu0
      %v643 = vadd.f32 %v252, %v642
      %644 = vmatprep.mubr.bf16.mxu0 0
      %645 = vmatmul.mubr.bf16.gmra.mrb[0].mxu0 %v461
      %v646 = vpop.f32.mrb[0].mxu0
      %v647 = vadd.f32 %v248, %v646
      %v648 = vpop.f32.mrb[0].mxu0
      %v649 = vadd.f32 %v252, %v648
      %v650 = vpop.f32.mrb[0].mxu0
      %v651 = vadd.f32 %v248, %v650
      %v652 = vpop.f32.mrb[0].mxu0
      %v653 = vadd.f32 %v252, %v652
      %654 = vmatprep.mubr.bf16.mxu0 0
      %655 = vmatmul.mubr.bf16.gmra.mrb[0].mxu0 %v464
      %v656 = vpop.f32.mrb[0].mxu0
      %v657 = vadd.f32 %v248, %v656
      %v658 = vpop.f32.mrb[0].mxu0
      %v659 = vadd.f32 %v252, %v658
      %v660 = vpop.f32.mrb[0].mxu0
      %v661 = vadd.f32 %v248, %v660
      %v662 = vpop.f32.mrb[0].mxu0
      %v663 = vadd.f32 %v252, %v662
      %664 = vmatprep.mubr.bf16.mxu0 0
      %665 = vmatmul.mubr.bf16.gmra.mrb[0].mxu0 %v467
      %v666 = vpop.f32.mrb[0].mxu0
      %v667 = vadd.f32 %v248, %v666
      %v668 = vpop.f32.mrb[0].mxu0
      %v669 = vadd.f32 %v252, %v668
      %v670 = vpop.f32.mrb[0].mxu0
      %v671 = vadd.f32 %v248, %v670
      %v672 = vpop.f32.mrb[0].mxu0
      %v673 = vadd.f32 %v252, %v672
      %674 = vmatprep.mubr.bf16.mxu0 0
      %675 = vmatmul.mubr.bf16.gmra.mrb[0].mxu0 %v470
      %v676 = vpop.f32.mrb[0].mxu0
      %v677 = vadd.f32 %v248, %v676
      %v678 = vpop.f32.mrb[0].mxu0
      %v679 = vadd.f32 %v252, %v678
      %v680 = vpop.f32.mrb[0].mxu0
      %v681 = vadd.f32 %v248, %v680
      %v682 = vpop.f32.mrb[0].mxu0
      %v683 = vadd.f32 %v252, %v682
      %684 = vmatprep.mubr.bf16.mxu0 0
      %685 = vmatmul.mubr.bf16.gmra.mrb[0].mxu0 %v473
      %v686 = vpop.f32.mrb[0].mxu0
      %v687 = vadd.f32 %v248, %v686
      %v688 = vpop.f32.mrb[0].mxu0
      %v689 = vadd.f32 %v252, %v688
      %v690 = vpop.f32.mrb[0].mxu0
      %v691 = vadd.f32 %v248, %v690
      %v692 = vpop.f32.mrb[0].mxu0
      %v693 = vadd.f32 %v252, %v692
      %694 = vmatprep.mubr.bf16.mxu0 0
      %695 = vmatmul.mubr.bf16.gmra.mrb[0].mxu0 %v476
      %v696 = vpop.f32.mrb[0].mxu0
      %v697 = vadd.f32 %v248, %v696
      %v698 = vpop.f32.mrb[0].mxu0
      %v699 = vadd.f32 %v252, %v698
      %v700 = vpop.f32.mrb[0].mxu0
      %v701 = vadd.f32 %v248, %v700
      %v702 = vpop.f32.mrb[0].mxu0
      %v703 = vadd.f32 %v252, %v702
      %704 = vmatprep.mubr.bf16.mxu0 0
      %705 = vmatmul.mubr.bf16.gmra.mrb[0].mxu0 %v479
      %v706 = vpop.f32.mrb[0].mxu0
      %v707 = vadd.f32 %v248, %v706
      %v708 = vpop.f32.mrb[0].mxu0
      %v709 = vadd.f32 %v252, %v708
      %v710 = vpop.f32.mrb[0].mxu0
      %v711 = vadd.f32 %v248, %v710
      %v712 = vpop.f32.mrb[0].mxu0
      %v713 = vadd.f32 %v252, %v712
      %714 = vmatprep.mubr.bf16.mxu0 0
      %715 = vmatmul.mubr.bf16.gmra.mrb[0].mxu0 %v482
      %v716 = vpop.f32.mrb[0].mxu0
      %v717 = vadd.f32 %v248, %v716
      %v718 = vpop.f32.mrb[0].mxu0
      %v719 = vadd.f32 %v252, %v718
      %v720 = vpop.f32.mrb[0].mxu0
      %v721 = vadd.f32 %v248, %v720
      %v722 = vpop.f32.mrb[0].mxu0
      %v723 = vadd.f32 %v252, %v722
      %724 = vmatprep.mubr.bf16.mxu0 0
      %725 = vmatmul.mubr.bf16.gmra.mrb[0].mxu0 %v485
      %v726 = vpop.f32.mrb[0].mxu0
      %v727 = vadd.f32 %v248, %v726
      %v728 = vpop.f32.mrb[0].mxu0
      %v729 = vadd.f32 %v252, %v728
      %v730 = vpop.f32.mrb[0].mxu0
      %v731 = vadd.f32 %v248, %v730
      %v732 = vpop.f32.mrb[0].mxu0
      %v733 = vadd.f32 %v252, %v732
      %734 = vmatprep.mubr.bf16.mxu0 0
      %735 = vmatmul.mubr.bf16.gmra.mrb[0].mxu0 %v488
      %v736 = vpop.f32.mrb[0].mxu0
      %v737 = vadd.f32 %v248, %v736
      %v738 = vpop.f32.mrb[0].mxu0
      %v739 = vadd.f32 %v252, %v738
      %v740 = vpop.f32.mrb[0].mxu0
      %v741 = vadd.f32 %v248, %v740
      %v742 = vpop.f32.mrb[0].mxu0
      %v743 = vadd.f32 %v252, %v742
      %744 = vmatprep.mubr.bf16.mxu0 0
      %745 = vmatmul.mubr.bf16.gmra.mrb[0].mxu0 %v491
      %v746 = vpop.f32.mrb[0].mxu0
      %v747 = vadd.f32 %v248, %v746
      %v748 = vpop.f32.mrb[0].mxu0
      %v749 = vadd.f32 %v252, %v748
      %v750 = vpop.f32.mrb[0].mxu0
      %v751 = vadd.f32 %v248, %v750
      %v752 = vpop.f32.mrb[0].mxu0
      %v753 = vadd.f32 %v252, %v752
      %754 = vmatprep.mubr.bf16.mxu0 0
      %755 = vmatmul.mubr.bf16.gmra.mrb[0].mxu0 %v494
      %v756 = vpop.f32.mrb[0].mxu0
      %v757 = vadd.f32 %v248, %v756
      %v758 = vpop.f32.mrb[0].mxu0
      %v759 = vadd.f32 %v252, %v758
      %v760 = vpop.f32.mrb[0].mxu0
      %v761 = vadd.f32 %v248, %v760
      %v762 = vpop.f32.mrb[0].mxu0
      %v763 = vadd.f32 %v252, %v762
      %764 = vmatprep.mubr.bf16.mxu0 0
      %765 = vmatmul.mubr.bf16.gmra.mrb[0].mxu0 %v497
      %v766 = vpop.f32.mrb[0].mxu0
      %v767 = vadd.f32 %v248, %v766
      %v768 = vpop.f32.mrb[0].mxu0
      %v769 = vadd.f32 %v252, %v768
      %v770 = vpop.f32.mrb[0].mxu0
      %v771 = vadd.f32 %v248, %v770
      %v772 = vpop.f32.mrb[0].mxu0
      %v773 = vadd.f32 %v252, %v772
      %774 = vmatprep.mubr.bf16.mxu0 0
      %775 = vmatmul.mubr.bf16.gmra.mrb[0].mxu0 %v500
      %v776 = vpop.f32.mrb[0].mxu0
      %v777 = vadd.f32 %v248, %v776
      %v778 = vpop.f32.mrb[0].mxu0
      %v779 = vadd.f32 %v252, %v778
      %v780 = vpop.f32.mrb[0].mxu0
      %v781 = vadd.f32 %v248, %v780
      %v782 = vpop.f32.mrb[0].mxu0
      %v783 = vadd.f32 %v252, %v782
      %784 = vmatprep.mubr.bf16.mxu0 0
      %785 = vmatmul.mubr.bf16.gmra.mrb[0].mxu0 %v503
      %v786 = vpop.f32.mrb[0].mxu0
      %v787 = vadd.f32 %v248, %v786
      %v788 = vpop.f32.mrb[0].mxu0
      %v789 = vadd.f32 %v252, %v788
      %v790 = vpop.f32.mrb[0].mxu0
      %v791 = vadd.f32 %v248, %v790
      %v792 = vpop.f32.mrb[0].mxu0
      %v793 = vadd.f32 %v252, %v792
      %794 = vmatprep.mubr.bf16.mxu0 0
      %795 = vmatmul.mubr.bf16.gmra.mrb[0].mxu0 %v506
      %v796 = vpop.f32.mrb[0].mxu0
      %v797 = vadd.f32 %v248, %v796
      %v798 = vpop.f32.mrb[0].mxu0
      %v799 = vadd.f32 %v252, %v798
      %v800 = vpop.f32.mrb[0].mxu0
      %v801 = vadd.f32 %v248, %v800
      %v802 = vpop.f32.mrb[0].mxu0
      %v803 = vadd.f32 %v252, %v802
      %804 = vmatprep.mubr.bf16.mxu0 0
      %805 = vmatmul.mubr.bf16.gmra.mrb[0].mxu0 %v509
      %v806 = vpop.f32.mrb[0].mxu0
      %v807 = vadd.f32 %v248, %v806
      %v808 = vpop.f32.mrb[0].mxu0
      %v809 = vadd.f32 %v252, %v808
      %v810 = vpop.f32.mrb[0].mxu0
      %v811 = vadd.f32 %v248, %v810
      %v812 = vpop.f32.mrb[0].mxu0
      %v813 = vadd.f32 %v252, %v812
      %814 = vmatprep.mubr.bf16.mxu0 0
      %815 = vmatmul.mubr.bf16.gmra.mrb[0].mxu0 %v512
      %v816 = vpop.f32.mrb[0].mxu0
      %v817 = vadd.f32 %v248, %v816
      %v818 = vpop.f32.mrb[0].mxu0
      %v819 = vadd.f32 %v252, %v818
      %v820 = vpop.f32.mrb[0].mxu0
      %v821 = vadd.f32 %v248, %v820
      %v822 = vpop.f32.mrb[0].mxu0
      %v823 = vadd.f32 %v252, %v822
      %824 = vmatprep.mubr.bf16.mxu0 0
      %825 = vmatmul.mubr.bf16.gmra.mrb[0].mxu0 %v515
      %v826 = vpop.f32.mrb[0].mxu0
      %v827 = vadd.f32 %v248, %v826
      %v828 = vpop.f32.mrb[0].mxu0
      %v829 = vadd.f32 %v252, %v828
      %v830 = vpop.f32.mrb[0].mxu0
      %v831 = vadd.f32 %v248, %v830
      %v832 = vpop.f32.mrb[0].mxu0
      %v833 = vadd.f32 %v252, %v832
      %834 = vmatprep.mubr.bf16.mxu0 0
      %835 = vmatmul.mubr.bf16.gmra.mrb[0].mxu0 %v518
      %v836 = vpop.f32.mrb[0].mxu0
      %v837 = vadd.f32 %v248, %v836
      %v838 = vpop.f32.mrb[0].mxu0
      %v839 = vadd.f32 %v252, %v838
      %v840 = vpop.f32.mrb[0].mxu0
      %v841 = vadd.f32 %v248, %v840
      %v842 = vpop.f32.mrb[0].mxu0
      %v843 = vadd.f32 %v252, %v842
      %844 = vmatprep.mubr.bf16.mxu0 0
      %845 = vmatmul.mubr.bf16.gmra.mrb[0].mxu0 %v521
      %v846 = vpop.f32.mrb[0].mxu0
      %v847 = vadd.f32 %v248, %v846
      %v848 = vpop.f32.mrb[0].mxu0
      %v849 = vadd.f32 %v252, %v848
      %v850 = vpop.f32.mrb[0].mxu0
      %v851 = vadd.f32 %v248, %v850
      %v852 = vpop.f32.mrb[0].mxu0
      %v853 = vadd.f32 %v252, %v852
      %854 = vmatprep.mubr.bf16.mxu0 0
      %855 = vmatmul.mubr.bf16.gmra.mrb[0].mxu0 %v524
      %v856 = vpop.f32.mrb[0].mxu0
      %v857 = vadd.f32 %v248, %v856
      %v858 = vpop.f32.mrb[0].mxu0
      %v859 = vadd.f32 %v252, %v858
      %v860 = vpop.f32.mrb[0].mxu0
      %v861 = vadd.f32 %v248, %v860
      %v862 = vpop.f32.mrb[0].mxu0
      %v863 = vadd.f32 %v252, %v862
      %864 = vmatprep.mubr.bf16.mxu0 0
      %865 = vmatmul.mubr.bf16.gmra.mrb[0].mxu0 %v527
      %v866 = vpop.f32.mrb[0].mxu0
      %v867 = vadd.f32 %v248, %v866
      %v868 = vpop.f32.mrb[0].mxu0
      %v869 = vadd.f32 %v252, %v868
      %v870 = vpop.f32.mrb[0].mxu0
      %v871 = vadd.f32 %v248, %v870
      %v872 = vpop.f32.mrb[0].mxu0
      %v873 = vadd.f32 %v252, %v872
      %874 = vmatprep.mubr.bf16.mxu0 0
      %875 = vmatmul.mubr.bf16.gmra.mrb[0].mxu0 %v530
      %v876 = vpop.f32.mrb[0].mxu0
      %v877 = vadd.f32 %v248, %v876
      %v878 = vpop.f32.mrb[0].mxu0
      %v879 = vadd.f32 %v252, %v878
      %v880 = vpop.f32.mrb[0].mxu0
      %v881 = vadd.f32 %v248, %v880
      %v882 = vpop.f32.mrb[0].mxu0
      %v883 = vadd.f32 %v252, %v882
      %884 = vdwg.mxu0
      %v885 = vmax.f32 %v567, 0.0
      %v886 = vmax.f32 %v569, 0.0
      %v887 = vmax.f32 %v571, 0.0
      %v888 = vmax.f32 %v573, 0.0
      %v889 = vmax.f32 %v577, 0.0
      %v890 = vmax.f32 %v579, 0.0
      %v891 = vmax.f32 %v581, 0.0
      %v892 = vmax.f32 %v583, 0.0
      %v893 = vmax.f32 %v587, 0.0
      %v894 = vmax.f32 %v589, 0.0
      %v895 = vmax.f32 %v591, 0.0
      %v896 = vmax.f32 %v593, 0.0
      %v897 = vmax.f32 %v597, 0.0
      %v898 = vmax.f32 %v599, 0.0
      %v899 = vmax.f32 %v601, 0.0
      %v900 = vmax.f32 %v603, 0.0
      %v901 = vmax.f32 %v607, 0.0
      %v902 = vmax.f32 %v609, 0.0
      %v903 = vmax.f32 %v611, 0.0
      %v904 = vmax.f32 %v613, 0.0
      %v905 = vmax.f32 %v617, 0.0
      %v906 = vmax.f32 %v619, 0.0
      %v907 = vmax.f32 %v621, 0.0
      %v908 = vmax.f32 %v623, 0.0
      %v909 = vmax.f32 %v627, 0.0
      %v910 = vmax.f32 %v629, 0.0
      %v911 = vmax.f32 %v631, 0.0
      %v912 = vmax.f32 %v633, 0.0
      %v913 = vmax.f32 %v637, 0.0
      %v914 = vmax.f32 %v639, 0.0
      %v915 = vmax.f32 %v641, 0.0
      %v916 = vmax.f32 %v643, 0.0
      %v917 = vmax.f32 %v647, 0.0
      %v918 = vmax.f32 %v649, 0.0
      %v919 = vmax.f32 %v651, 0.0
      %v920 = vmax.f32 %v653, 0.0
      %v921 = vmax.f32 %v657, 0.0
      %v922 = vmax.f32 %v659, 0.0
      %v923 = vmax.f32 %v661, 0.0
      %v924 = vmax.f32 %v663, 0.0
      %v925 = vmax.f32 %v667, 0.0
      %v926 = vmax.f32 %v669, 0.0
      %v927 = vmax.f32 %v671, 0.0
      %v928 = vmax.f32 %v673, 0.0
      %v929 = vmax.f32 %v677, 0.0
      %v930 = vmax.f32 %v679, 0.0
      %v931 = vmax.f32 %v681, 0.0
      %v932 = vmax.f32 %v683, 0.0
      %v933 = vmax.f32 %v687, 0.0
      %v934 = vmax.f32 %v689, 0.0
      %v935 = vmax.f32 %v691, 0.0
      %v936 = vmax.f32 %v693, 0.0
      %v937 = vmax.f32 %v697, 0.0
      %v938 = vmax.f32 %v699, 0.0
      %v939 = vmax.f32 %v701, 0.0
      %v940 = vmax.f32 %v703, 0.0
      %v941 = vmax.f32 %v707, 0.0
      %v942 = vmax.f32 %v709, 0.0
      %v943 = vmax.f32 %v711, 0.0
      %v944 = vmax.f32 %v713, 0.0
      %v945 = vmax.f32 %v717, 0.0
      %v946 = vmax.f32 %v719, 0.0
      %v947 = vmax.f32 %v721, 0.0
      %v948 = vmax.f32 %v723, 0.0
      %v949 = vmax.f32 %v727, 0.0
      %v950 = vmax.f32 %v729, 0.0
      %v951 = vmax.f32 %v731, 0.0
      %v952 = vmax.f32 %v733, 0.0
      %v953 = vmax.f32 %v737, 0.0
      %v954 = vmax.f32 %v739, 0.0
      %v955 = vmax.f32 %v741, 0.0
      %v956 = vmax.f32 %v743, 0.0
      %v957 = vmax.f32 %v747, 0.0
      %v958 = vmax.f32 %v749, 0.0
      %v959 = vmax.f32 %v751, 0.0
      %v960 = vmax.f32 %v753, 0.0
      %v961 = vmax.f32 %v757, 0.0
      %v962 = vmax.f32 %v759, 0.0
      %v963 = vmax.f32 %v761, 0.0
      %v964 = vmax.f32 %v763, 0.0
      %v965 = vmax.f32 %v767, 0.0
      %v966 = vmax.f32 %v769, 0.0
      %v967 = vmax.f32 %v771, 0.0
      %v968 = vmax.f32 %v773, 0.0
      %v969 = vmax.f32 %v777, 0.0
      %v970 = vmax.f32 %v779, 0.0
      %v971 = vmax.f32 %v781, 0.0
      %v972 = vmax.f32 %v783, 0.0
      %v973 = vmax.f32 %v787, 0.0
      %v974 = vmax.f32 %v789, 0.0
      %v975 = vmax.f32 %v791, 0.0
      %v976 = vmax.f32 %v793, 0.0
      %v977 = vmax.f32 %v797, 0.0
      %v978 = vmax.f32 %v799, 0.0
      %v979 = vmax.f32 %v801, 0.0
      %v980 = vmax.f32 %v803, 0.0
      %v981 = vmax.f32 %v807, 0.0
      %v982 = vmax.f32 %v809, 0.0
      %v983 = vmax.f32 %v811, 0.0
      %v984 = vmax.f32 %v813, 0.0
      %v985 = vmax.f32 %v817, 0.0
      %v986 = vmax.f32 %v819, 0.0
      %v987 = vmax.f32 %v821, 0.0
      %v988 = vmax.f32 %v823, 0.0
      %v989 = vmax.f32 %v827, 0.0
      %v990 = vmax.f32 %v829, 0.0
      %v991 = vmax.f32 %v831, 0.0
      %v992 = vmax.f32 %v833, 0.0
      %v993 = vmax.f32 %v837, 0.0
      %v994 = vmax.f32 %v839, 0.0
      %v995 = vmax.f32 %v841, 0.0
      %v996 = vmax.f32 %v843, 0.0
      %v997 = vmax.f32 %v847, 0.0
      %v998 = vmax.f32 %v849, 0.0
      %v999 = vmax.f32 %v851, 0.0
      %v1000 = vmax.f32 %v853, 0.0
      %v1001 = vmax.f32 %v857, 0.0
      %v1002 = vmax.f32 %v859, 0.0
      %v1003 = vmax.f32 %v861, 0.0
      %v1004 = vmax.f32 %v863, 0.0
      %v1005 = vmax.f32 %v867, 0.0
      %v1006 = vmax.f32 %v869, 0.0
      %v1007 = vmax.f32 %v871, 0.0
      %v1008 = vmax.f32 %v873, 0.0
      %v1009 = vmax.f32 %v877, 0.0
      %v1010 = vmax.f32 %v879, 0.0
      %v1011 = vmax.f32 %v881, 0.0
      %v1012 = vmax.f32 %v883, 0.0
      %v1013 = vadd.f32 %v885, %v887
      %v1014 = vadd.f32 %v1013, %v889
      %v1015 = vadd.f32 %v1014, %v891
      %v1016 = vadd.f32 %v1015, %v893
      %v1017 = vadd.f32 %v1016, %v895
      %v1018 = vadd.f32 %v1017, %v897
      %v1019 = vadd.f32 %v1018, %v899
      %v1020 = vadd.f32 %v1019, %v901
      %v1021 = vadd.f32 %v1020, %v903
      %v1022 = vadd.f32 %v1021, %v905
      %v1023 = vadd.f32 %v1022, %v907
      %v1024 = vadd.f32 %v1023, %v909
      %v1025 = vadd.f32 %v1024, %v911
      %v1026 = vadd.f32 %v1025, %v913
      %v1027 = vadd.f32 %v1026, %v915
      %v1028 = vadd.f32 %v1027, %v917
      %v1029 = vadd.f32 %v1028, %v919
      %v1030 = vadd.f32 %v1029, %v921
      %v1031 = vadd.f32 %v1030, %v923
      %v1032 = vadd.f32 %v1031, %v925
      %v1033 = vadd.f32 %v1032, %v927
      %v1034 = vadd.f32 %v1033, %v929
      %v1035 = vadd.f32 %v1034, %v931
      %v1036 = vadd.f32 %v1035, %v933
      %v1037 = vadd.f32 %v1036, %v935
      %v1038 = vadd.f32 %v1037, %v937
      %v1039 = vadd.f32 %v1038, %v939
      %v1040 = vadd.f32 %v1039, %v941
      %v1041 = vadd.f32 %v1040, %v943
      %v1042 = vadd.f32 %v1041, %v945
      %v1043 = vadd.f32 %v1042, %v947
      %v1044 = vadd.f32 %v886, %v888
      %v1045 = vadd.f32 %v1044, %v890
      %v1046 = vadd.f32 %v1045, %v892
      %v1047 = vadd.f32 %v1046, %v894
      %v1048 = vadd.f32 %v1047, %v896
      %v1049 = vadd.f32 %v1048, %v898
      %v1050 = vadd.f32 %v1049, %v900
      %v1051 = vadd.f32 %v1050, %v902
      %v1052 = vadd.f32 %v1051, %v904
      %v1053 = vadd.f32 %v1052, %v906
      %v1054 = vadd.f32 %v1053, %v908
      %v1055 = vadd.f32 %v1054, %v910
      %v1056 = vadd.f32 %v1055, %v912
      %v1057 = vadd.f32 %v1056, %v914
      %v1058 = vadd.f32 %v1057, %v916
      %v1059 = vadd.f32 %v1058, %v918
      %v1060 = vadd.f32 %v1059, %v920
      %v1061 = vadd.f32 %v1060, %v922
      %v1062 = vadd.f32 %v1061, %v924
      %v1063 = vadd.f32 %v1062, %v926
      %v1064 = vadd.f32 %v1063, %v928
      %v1065 = vadd.f32 %v1064, %v930
      %v1066 = vadd.f32 %v1065, %v932
      %v1067 = vadd.f32 %v1066, %v934
      %v1068 = vadd.f32 %v1067, %v936
      %v1069 = vadd.f32 %v1068, %v938
      %v1070 = vadd.f32 %v1069, %v940
      %v1071 = vadd.f32 %v1070, %v942
      %v1072 = vadd.f32 %v1071, %v944
      %v1073 = vadd.f32 %v1072, %v946
      %v1074 = vadd.f32 %v1073, %v948
      %v1075 = vadd.f32 %v949, %v951
      %v1076 = vadd.f32 %v1075, %v953
      %v1077 = vadd.f32 %v1076, %v955
      %v1078 = vadd.f32 %v1077, %v957
      %v1079 = vadd.f32 %v1078, %v959
      %v1080 = vadd.f32 %v1079, %v961
      %v1081 = vadd.f32 %v1080, %v963
      %v1082 = vadd.f32 %v1081, %v965
      %v1083 = vadd.f32 %v1082, %v967
      %v1084 = vadd.f32 %v1083, %v969
      %v1085 = vadd.f32 %v1084, %v971
      %v1086 = vadd.f32 %v1085, %v973
      %v1087 = vadd.f32 %v1086, %v975
      %v1088 = vadd.f32 %v1087, %v977
      %v1089 = vadd.f32 %v1088, %v979
      %v1090 = vadd.f32 %v1089, %v981
      %v1091 = vadd.f32 %v1090, %v983
      %v1092 = vadd.f32 %v1091, %v985
      %v1093 = vadd.f32 %v1092, %v987
      %v1094 = vadd.f32 %v1093, %v989
      %v1095 = vadd.f32 %v1094, %v991
      %v1096 = vadd.f32 %v1095, %v993
      %v1097 = vadd.f32 %v1096, %v995
      %v1098 = vadd.f32 %v1097, %v997
      %v1099 = vadd.f32 %v1098, %v999
      %v1100 = vadd.f32 %v1099, %v1001
      %v1101 = vadd.f32 %v1100, %v1003
      %v1102 = vadd.f32 %v1101, %v1005
      %v1103 = vadd.f32 %v1102, %v1007
      %v1104 = vadd.f32 %v1103, %v1009
      %v1105 = vadd.f32 %v1104, %v1011
      %v1106 = vadd.f32 %v950, %v952
      %v1107 = vadd.f32 %v1106, %v954
      %v1108 = vadd.f32 %v1107, %v956
      %v1109 = vadd.f32 %v1108, %v958
      %v1110 = vadd.f32 %v1109, %v960
      %v1111 = vadd.f32 %v1110, %v962
      %v1112 = vadd.f32 %v1111, %v964
      %v1113 = vadd.f32 %v1112, %v966
      %v1114 = vadd.f32 %v1113, %v968
      %v1115 = vadd.f32 %v1114, %v970
      %v1116 = vadd.f32 %v1115, %v972
      %v1117 = vadd.f32 %v1116, %v974
      %v1118 = vadd.f32 %v1117, %v976
      %v1119 = vadd.f32 %v1118, %v978
      %v1120 = vadd.f32 %v1119, %v980
      %v1121 = vadd.f32 %v1120, %v982
      %v1122 = vadd.f32 %v1121, %v984
      %v1123 = vadd.f32 %v1122, %v986
      %v1124 = vadd.f32 %v1123, %v988
      %v1125 = vadd.f32 %v1124, %v990
      %v1126 = vadd.f32 %v1125, %v992
      %v1127 = vadd.f32 %v1126, %v994
      %v1128 = vadd.f32 %v1127, %v996
      %v1129 = vadd.f32 %v1128, %v998
      %v1130 = vadd.f32 %v1129, %v1000
      %v1131 = vadd.f32 %v1130, %v1002
      %v1132 = vadd.f32 %v1131, %v1004
      %v1133 = vadd.f32 %v1132, %v1006
      %v1134 = vadd.f32 %v1133, %v1008
      %v1135 = vadd.f32 %v1134, %v1010
      %v1136 = vadd.f32 %v1135, %v1012
      %v1137 = vrot.slane %v1043, 4
      %v1138 = vadd.f32 %v1043, %v1137
      %v1139 = vrot.slane %v1138, 2
      %v1140 = vadd.f32 %v1138, %v1139
      %v1141 = vrot.slane %v1140, 1
      %v1142 = vadd.f32 %v1140, %v1141
      %v1143 = vrot.slane %v1074, 4
      %v1144 = vadd.f32 %v1074, %v1143
      %v1145 = vrot.slane %v1144, 2
      %v1146 = vadd.f32 %v1144, %v1145
      %v1147 = vrot.slane %v1146, 1
      %v1148 = vadd.f32 %v1146, %v1147
      %v1149 = vrot.slane %v1105, 4
      %v1150 = vadd.f32 %v1105, %v1149
      %v1151 = vrot.slane %v1150, 2
      %v1152 = vadd.f32 %v1150, %v1151
      %v1153 = vrot.slane %v1152, 1
      %v1154 = vadd.f32 %v1152, %v1153
      %v1155 = vrot.slane %v1136, 4
      %v1156 = vadd.f32 %v1136, %v1155
      %v1157 = vrot.slane %v1156, 2
      %v1158 = vadd.f32 %v1156, %v1157
      %v1159 = vrot.slane %v1158, 1
      %v1160 = vadd.f32 %v1158, %v1159
      %v1161 = vmul.f32 %v1142, 0.00390625
      %v1162 = vmul.f32 %v1148, 0.00390625
      %v1163 = vmul.f32 %v1154, 0.00390625
      %v1164 = vmul.f32 %v1160, 0.00390625
      %v1165 = vpack.c.bf16 %v1161, %v1161
      %v1166 = vpack.c.bf16 %v1162, %v1162
      %v1167 = vpack.c.bf16 %v1163, %v1163
      %v1168 = vpack.c.bf16 %v1164, %v1164
      %v1173 = vcombine.low %v1165, %v1166
      %v1175 = vunpack.c.l.s4 1966171168
      %v1176 = vunpack.c.0.s8 %v1175
      %v1177 = vlaneseq
      %v1178 = vshrl.u32 %v1177, 7
      %v1179 = vsub.s32 %v1176, %v1178
      %v1180 = vrot.slane %v1173, %v1179
      %v1182 = vunpack.c.l.s4 1966171168
      %v1183 = vunpack.c.0.s8 %v1182
      %v1184 = vlaneseq
      %v1185 = vshrl.u32 %v1184, 7
      %v1186 = vsub.s32 %v1183, %v1185
      %v1187 = vrot.slane %v1180, %v1186
      %v1188 = vcombine.low %v1167, %v1168
      %v1190 = vunpack.c.l.s4 1966171168
      %v1191 = vunpack.c.0.s8 %v1190
      %v1192 = vlaneseq
      %v1193 = vshrl.u32 %v1192, 7
      %v1194 = vsub.s32 %v1191, %v1193
      %v1195 = vrot.slane %v1188, %v1194
      %v1197 = vunpack.c.l.s4 1966171168
      %v1198 = vunpack.c.0.s8 %v1197
      %v1199 = vlaneseq
      %v1200 = vshrl.u32 %v1199, 7
      %v1201 = vsub.s32 %v1198, %v1200
      %v1202 = vrot.slane %v1195, %v1201
      %v1204 = vunpack.c.l.s4 1935823168
      %v1205 = vunpack.c.0.s8 %v1204
      %v1206 = vlaneseq
      %v1207 = vshrl.u32 %v1206, 7
      %v1208 = vsub.s32 %v1205, %v1207
      %v1209 = vrot.slane %v1187, %v1208
      %v1211 = vunpack.c.l.s4 1935823168
      %v1212 = vunpack.c.0.s8 %v1211
      %v1213 = vlaneseq
      %v1214 = vshrl.u32 %v1213, 7
      %v1215 = vsub.s32 %v1212, %v1214
      %v1216 = vrot.slane %v1209, %v1215
      %v1218 = vunpack.c.l.s4 1935823168
      %v1219 = vunpack.c.0.s8 %v1218
      %v1220 = vlaneseq
      %v1221 = vshrl.u32 %v1220, 7
      %v1222 = vsub.s32 %v1219, %v1221
      %v1223 = vrot.slane %v1202, %v1222
      %v1225 = vunpack.c.l.s4 1935823168
      %v1226 = vunpack.c.0.s8 %v1225
      %v1227 = vlaneseq
      %v1228 = vshrl.u32 %v1227, 7
      %v1229 = vsub.s32 %v1226, %v1228
      %v1230 = vrot.slane %v1223, %v1229
      %v1231 = vunpack.c.l.b16 %v1216
      %v1232 = vunpack.c.h.b16 %v1216
      %v1233 = vunpack.c.l.b16 %v1230
      %v1234 = vunpack.c.h.b16 %v1230
      %v1235 = vrot.slane %v1233, 7
      %vm1236 = vcmask 1041409
      %v1237 = vsel %vm1236, %v1235, %v1231
      %v1238 = vrot.slane %v1234, 7
      %v1239 = vsel %vm1236, %v1238, %v1232
      %v1240 = vpack.c.b16 %v1239, %v1237
      %v1242 = vunpack.c.l.s4 1966171168
      %v1243 = vunpack.c.0.s8 %v1242
      %v1244 = vlaneseq
      %v1245 = vshrl.u32 %v1244, 7
      %v1246 = vsub.s32 %v1243, %v1245
      %v1247 = vrot.slane %v1240, %v1246
      %v1249 = vunpack.c.l.s4 1966171168
      %v1250 = vunpack.c.0.s8 %v1249
      %v1251 = vlaneseq
      %v1252 = vshrl.u32 %v1251, 7
      %v1253 = vsub.s32 %v1250, %v1252
      %v1254 = vrot.slane %v1247, %v1253
      %1256 = vst [vmem:[%s173] sm:$0x3] %v1254
      %p1257 = scmp.lt.s32.totalorder %s14, 1
      %s1258 = scalar_select %p1257, %s14, 1
      %s1259 = smul.addr %s1258, 2
      %s1260 = scalar_lea.vmem %s3, %s1259
      // Predicated region
      $region33: #{encoder_cnn_forward.2} parent=31 // pred_check
        %p1261 = pneg %p100
      $region34: #{encoder_cnn_forward.2} parent=31 // pred_check_branch
        %1263 = sbr.rel (%p1261) target = $region36
      $region35: #{encoder_cnn_forward.2} parent=31 // pred_region
        _
      $region36: #{encoder_cnn_forward.2} parent=31 // pred_fallthru
        _
    $region32: #{encoder_cnn_forward.2} parent=5 // pred_fallthru
      _
    %p1264 = scmp.le.s32.totalorder 2, %s9
    // Predicated region
    $region37: #{encoder_cnn_forward.2} parent=5 // pred_check
      %p1265 = pneg %p1264
    $region38: #{encoder_cnn_forward.2} parent=5 // pred_check_branch
      %1267 = sbr.rel (%p1265) target = $region40
    $region39: #{encoder_cnn_forward.2} parent=5 // pred_region
      %s1268 = ssub.s32 %s9, 2
      // Predicated region
      $region41: #{encoder_cnn_forward.2} parent=39 // pred_check
        %p1269 = pneg %p106
      $region42: #{encoder_cnn_forward.2} parent=39 // pred_check_branch
        %1271 = sbr.rel (%p1269) target = $region44
      $region43: #{encoder_cnn_forward.2} parent=39 // pred_region
        %p1272 = scmp.lt.s32.totalorder %s15, 1
        %s1273 = scalar_select %p1272, %s15, 1
        %s1274 = smul.addr %s1273, 2
        %s1275 = scalar_lea.vmem %s3, %s1274
      $region44: #{encoder_cnn_forward.2} parent=39 // pred_fallthru
        _
    $region40: #{encoder_cnn_forward.2} parent=5 // pred_fallthru
      _
  $region6: #{encoder_cnn_forward.2} parent=0 // loop_footer
    %s13 = sadd.s32 1, %s9
  $region7: #{encoder_cnn_forward.2} parent=0 // loop_footer_branch
    %8 = sbr.rel target = $region3
  $region8: #{encoder_cnn_forward.2} parent=0 // loop_exit
    _

</llo_original>
